<compile_context>
chip_gen: v6e
topology: v6e:2x2x1
jax: 0.10.0
libtpu: 0.0.40
codegen_flags: <defaults>
</compile_context>

<pallas_src>
import functools

import jax
import jax.numpy as jnp
from jax.experimental import pallas as pl
from jax.experimental.pallas import tpu as pltpu

C_IN = 10
C_OUT = 10
K = 3
BN_EPS = 1e-5
STATS_W = 128  # lane-dense stats tile: lane 0 = sum, lane 1 = sum_sq


def _round_up(x, m):
    return (x + m - 1) // m * m


def _conv_stats_kernel(x_ref, w_ref, mask_ref, conv_ref, stats_ref, *,
                       b_blk, tap_offsets, s_out):
    # x_ref:     (b_blk, C_IN, s_in)    f32  zero-padded, flattened images
    # w_ref:     (K*K, C_OUT, C_IN)     f32  per-tap conv weights (flipped ConvT)
    # mask_ref:  (1, s_out)             f32  1.0 on valid output lanes
    # conv_ref:  (b_blk, C_OUT, s_out)  f32  lane-dense flattened conv output
    # stats_ref: (C_OUT, STATS_W)       f32  block-local [sum | sum_sq | 0...]
    m = mask_ref[...]
    sum_acc = jnp.zeros((C_OUT, 1), jnp.float32)
    ssq_acc = jnp.zeros((C_OUT, 1), jnp.float32)

    for b in range(b_blk):                      # static unroll over the image block
        acc = jnp.zeros((C_OUT, s_out), jnp.float32)
        for t, off in enumerate(tap_offsets):   # 9 accumulated MXU dots, no concat
            acc = acc + jnp.dot(w_ref[t], x_ref[b, :, off:off + s_out],
                                preferred_element_type=jnp.float32)
        conv_ref[b] = acc
        am = acc * m
        sum_acc = sum_acc + jnp.sum(am, axis=1, keepdims=True)
        ssq_acc = ssq_acc + jnp.sum(am * acc, axis=1, keepdims=True)

    lane = jax.lax.broadcasted_iota(jnp.int32, (C_OUT, STATS_W), 1)
    stats_ref[...] = jnp.where(lane == 0, sum_acc,
                               jnp.where(lane == 1, ssq_acc, 0.0))


@jax.jit
def bn_after_conv_transpose2d(x, w_t, b, gamma, beta):
    """x: (N, C_in, H, W) f32; w_t: (C_in, C_out, K, K) [PyTorch ConvTranspose2d
    layout]; b / gamma / beta: (C_out,) f32."""
    del b  # per-channel conv bias is exactly cancelled by training-mode BN
    n, c_in, h, w = x.shape
    assert c_in == C_IN
    h_out, w_out = h + K - 1, w + K - 1            # ConvTranspose output size
    h_pad, w_pad = h + 2 * (K - 1), w + 2 * (K - 1)

    s_flat = h_out * w_pad                         # flat conv span (incl. junk cols)
    s_out = _round_up(s_flat, 128)                 # lane-dense store width
    max_off = (K - 1) * w_pad + (K - 1)
    s_in = _round_up(s_out + max_off, 128)

    # images per grid step: amortize per-step overhead, keep >=2 steps when possible
    b_blk = max(1, min(8, n // 4))
    n_blocks = -(-n // b_blk)
    n_pad = n_blocks * b_blk

    # --- wrapper-side layout prep (shape-only).  Zero batch-padding is exact:
    # padded images give all-zero conv outputs -> zero BN contributions. ---
    x_pad = jnp.pad(x, ((0, n_pad - n), (0, 0), (K - 1, K - 1), (K - 1, K - 1)))
    x_flat = x_pad.reshape(n_pad, C_IN, h_pad * w_pad)
    x_flat = jnp.pad(x_flat, ((0, 0), (0, 0), (0, s_in - h_pad * w_pad)))

    # ConvTranspose == full conv with flipped kernel and swapped channel dims.
    w_conv = jnp.transpose(w_t[:, :, ::-1, ::-1], (1, 0, 2, 3))      # (C_out, C_in, K, K)
    w_taps = jnp.transpose(w_conv, (2, 3, 0, 1)).reshape(K * K, C_OUT, C_IN)

    # lane-validity mask: drop junk columns (q >= W_out) and the 128-pad tail.
    j = jnp.arange(s_out, dtype=jnp.int32)
    mask = (((j % w_pad) < w_out) & (j < s_flat)).astype(jnp.float32)[None, :]

    tap_offsets = tuple(kh * w_pad + kw for kh in range(K) for kw in range(K))

    blk_bytes = 4 * (b_blk * C_IN * s_in + b_blk * C_OUT * s_out
                     + C_OUT * STATS_W + K * K * C_OUT * C_IN + s_out)
    try:
        vmem_cap = int(pltpu.get_tpu_info().vmem_capacity_bytes)
    except Exception:  # conservative default: smallest generation (v7x, 64 MiB/TC)
        vmem_cap = 64 * 1024 * 1024
    vmem_limit = int(min(min(48 * 1024 * 1024, (3 * vmem_cap) // 4),
                         max(16 * 1024 * 1024, 6 * blk_bytes)))
    cparams = pltpu.CompilerParams(dimension_semantics=("parallel",),
                                   vmem_limit_bytes=vmem_limit)

    # --- phase 1: conv (per-tap accumulated MXU dots) + per-block BN partials ---
    conv, stats = pl.pallas_call(
        functools.partial(_conv_stats_kernel, b_blk=b_blk,
                          tap_offsets=tap_offsets, s_out=s_out),
        grid=(n_blocks,),
        in_specs=[
            pl.BlockSpec((b_blk, C_IN, s_in), lambda i: (i, 0, 0)),
            pl.BlockSpec((K * K, C_OUT, C_IN), lambda i: (0, 0, 0)),
            pl.BlockSpec((1, s_out), lambda i: (0, 0)),
        ],
        out_specs=[
            pl.BlockSpec((b_blk, C_OUT, s_out), lambda i: (i, 0, 0)),
            pl.BlockSpec((None, C_OUT, STATS_W), lambda i: (i, 0, 0)),
        ],
        out_shape=[
            jax.ShapeDtypeStruct((n_pad, C_OUT, s_out), jnp.float32),
            jax.ShapeDtypeStruct((n_blocks, C_OUT, STATS_W), jnp.float32),
        ],
        compiler_params=cparams,
    )(x_flat, w_taps, mask)

    # --- fold BN (training-mode batch stats) into one per-channel scale/shift ---
    count = jnp.float32(n * h_out * w_out)
    tot = jnp.sum(stats, axis=0)                              # (C_OUT, STATS_W)
    mean = tot[:, 0] / count
    var = jnp.maximum(tot[:, 1] / count - mean * mean, 0.0)   # biased variance
    scale = gamma * jax.lax.rsqrt(var + BN_EPS)               # (C_out,)
    shift = beta - mean * scale

    # --- phase 2 fused into the XLA epilogue: relu(conv*scale + shift) + de-flatten ---
    y_flat = jnp.maximum(conv[:n] * scale[None, :, None] + shift[None, :, None], 0.0)
    y = y_flat[:, :, :s_flat].reshape(n, C_OUT, h_out, w_pad)[:, :, :, :w_out]
    return y


def _reference(x, w_t, b, gamma, beta):
    """Pure-JAX reference for ConvTranspose2d + training-mode BatchNorm2d + ReLU."""
    w_conv = jnp.transpose(w_t[:, :, ::-1, ::-1], (1, 0, 2, 3))   # (C_out, C_in, K, K)
    y = jax.lax.conv_general_dilated(
        x, w_conv, window_strides=(1, 1),
        padding=((K - 1, K - 1), (K - 1, K - 1)),
        dimension_numbers=("NCHW", "OIHW", "NCHW"))
    y = y + b[None, :, None, None]
    mean = y.mean(axis=(0, 2, 3), keepdims=True)
    var = ((y - mean) ** 2).mean(axis=(0, 2, 3), keepdims=True)
    y = (y - mean) * jax.lax.rsqrt(var + BN_EPS) * gamma[None, :, None, None] \
        + beta[None, :, None, None]
    return jnp.maximum(y, 0.0)


if __name__ == "__main__":
    key = jax.random.PRNGKey(0)
    k_x, k_w, k_b = jax.random.split(key, 3)

    # Small shapes consistent with the module: ConvTranspose2d expects (N, 10, H, W).
    N, H, W = 2, 16, 16
    x = jax.random.normal(k_x, (N, C_IN, H, W), dtype=jnp.float32)

    # PyTorch-style init: ConvTranspose2d weight (C_in, C_out, K, K) ~ U(-b, b);
    # BN defaults gamma=1, beta=0.
    bound = 1.0 / jnp.sqrt(jnp.float32(C_IN * K * K))
    w_t = jax.random.uniform(k_w, (C_IN, C_OUT, K, K), jnp.float32, -bound, bound)
    b = jax.random.uniform(k_b, (C_OUT,), jnp.float32, -bound, bound)
    gamma = jnp.ones((C_OUT,), jnp.float32)
    beta = jnp.zeros((C_OUT,), jnp.float32)

    out = bn_after_conv_transpose2d(x, w_t, b, gamma, beta)
    out = jax.block_until_ready(out)

    ref = _reference(x, w_t, b, gamma, beta)
    assert out.shape == (N, C_OUT, H + K - 1, W + K - 1), out.shape
    err = float(jnp.max(jnp.abs(out - ref)))
    assert err < 1e-4, err

    print("KERNEL_OK")
</pallas_src>

<mosaic_0001>
module attributes {stable_mosaic.version = 11 : i64} {
  func.func @_conv_stats_kernel(%arg0: i32, %arg1: memref<1x10x512xf32, #tpu.memory_space<vmem>>, %arg2: memref<9x10x10xf32, #tpu.memory_space<vmem>>, %arg3: memref<1x384xf32, #tpu.memory_space<vmem>>, %arg4: memref<1x10x384xf32, #tpu.memory_space<vmem>>, %arg5: memref<1x10x128xf32, #tpu.memory_space<vmem>>) attributes {dimension_semantics = [#tpu.dimension_semantics<parallel>], iteration_bounds = array<i64: 2>, scalar_prefetch = 0 : i64, scratch_operands = 0 : i64, tpu.core_type = #tpu.core_type<tc>, window_params = [{transform_indices = @transform_0, window_bounds = array<i64: 1, 10, 512>}, {pipeline_mode = #tpu.pipeline_mode<synchronous>, transform_indices = @transform_1, window_bounds = array<i64: 9, 10, 10>}, {pipeline_mode = #tpu.pipeline_mode<synchronous>, transform_indices = @transform_2, window_bounds = array<i64: 1, 384>}, {transform_indices = @transform_3, window_bounds = array<i64: 1, 10, 384>}, {transform_indices = @transform_4, window_bounds = array<i64: 1, 10, 128>}]} {
    %c0 = arith.constant 0 : index
    %c0_0 = arith.constant 0 : index
    %0 = vector.load %arg3[%c0, %c0_0] : memref<1x384xf32, #tpu.memory_space<vmem>>, vector<1x384xf32>
    %cst = arith.constant 0.000000e+00 : f32
    %1 = vector.broadcast %cst : f32 to vector<10x1xf32>
    %cst_1 = arith.constant 0.000000e+00 : f32
    %2 = vector.broadcast %cst_1 : f32 to vector<10x1xf32>
    %cst_2 = arith.constant 0.000000e+00 : f32
    %3 = vector.broadcast %cst_2 : f32 to vector<10x384xf32>
    %c0_3 = arith.constant 0 : index
    %c0_4 = arith.constant 0 : index
    %c0_5 = arith.constant 0 : index
    %4 = vector.load %arg2[%c0_3, %c0_4, %c0_5] : memref<9x10x10xf32, #tpu.memory_space<vmem>>, vector<1x10x10xf32>
    %5 = vector.shape_cast %4 : vector<1x10x10xf32> to vector<10x10xf32>
    %c0_6 = arith.constant 0 : index
    %c0_7 = arith.constant 0 : index
    %c0_8 = arith.constant 0 : index
    %6 = vector.load %arg1[%c0_6, %c0_7, %c0_8] : memref<1x10x512xf32, #tpu.memory_space<vmem>>, vector<1x10x384xf32>
    %7 = vector.shape_cast %6 : vector<1x10x384xf32> to vector<10x384xf32>
    %cst_9 = arith.constant dense<0.000000e+00> : vector<10x384xf32>
    %8 = tpu.matmul %5, %7, %cst_9 {dimension_numbers = #tpu.dot_dimension_numbers<[1], [0], [0], [1], [0, 0, 1, 1], [], []>} : vector<10x10xf32>, vector<10x384xf32>, vector<10x384xf32> -> vector<10x384xf32>
    %9 = arith.addf %3, %8 : vector<10x384xf32>
    %c1 = arith.constant 1 : index
    %c0_10 = arith.constant 0 : index
    %c0_11 = arith.constant 0 : index
    %10 = vector.load %arg2[%c1, %c0_10, %c0_11] : memref<9x10x10xf32, #tpu.memory_space<vmem>>, vector<1x10x10xf32>
    %11 = vector.shape_cast %10 : vector<1x10x10xf32> to vector<10x10xf32>
    %c0_12 = arith.constant 0 : index
    %c0_13 = arith.constant 0 : index
    %c1_14 = arith.constant 1 : index
    %12 = vector.load %arg1[%c0_12, %c0_13, %c1_14] : memref<1x10x512xf32, #tpu.memory_space<vmem>>, vector<1x10x384xf32>
    %13 = vector.shape_cast %12 : vector<1x10x384xf32> to vector<10x384xf32>
    %cst_15 = arith.constant dense<0.000000e+00> : vector<10x384xf32>
    %14 = tpu.matmul %11, %13, %cst_15 {dimension_numbers = #tpu.dot_dimension_numbers<[1], [0], [0], [1], [0, 0, 1, 1], [], []>} : vector<10x10xf32>, vector<10x384xf32>, vector<10x384xf32> -> vector<10x384xf32>
    %15 = arith.addf %9, %14 : vector<10x384xf32>
    %c2 = arith.constant 2 : index
    %c0_16 = arith.constant 0 : index
    %c0_17 = arith.constant 0 : index
    %16 = vector.load %arg2[%c2, %c0_16, %c0_17] : memref<9x10x10xf32, #tpu.memory_space<vmem>>, vector<1x10x10xf32>
    %17 = vector.shape_cast %16 : vector<1x10x10xf32> to vector<10x10xf32>
    %c0_18 = arith.constant 0 : index
    %c0_19 = arith.constant 0 : index
    %c2_20 = arith.constant 2 : index
    %18 = vector.load %arg1[%c0_18, %c0_19, %c2_20] : memref<1x10x512xf32, #tpu.memory_space<vmem>>, vector<1x10x384xf32>
    %19 = vector.shape_cast %18 : vector<1x10x384xf32> to vector<10x384xf32>
    %cst_21 = arith.constant dense<0.000000e+00> : vector<10x384xf32>
    %20 = tpu.matmul %17, %19, %cst_21 {dimension_numbers = #tpu.dot_dimension_numbers<[1], [0], [0], [1], [0, 0, 1, 1], [], []>} : vector<10x10xf32>, vector<10x384xf32>, vector<10x384xf32> -> vector<10x384xf32>
    %21 = arith.addf %15, %20 : vector<10x384xf32>
    %c3 = arith.constant 3 : index
    %c0_22 = arith.constant 0 : index
    %c0_23 = arith.constant 0 : index
    %22 = vector.load %arg2[%c3, %c0_22, %c0_23] : memref<9x10x10xf32, #tpu.memory_space<vmem>>, vector<1x10x10xf32>
    %23 = vector.shape_cast %22 : vector<1x10x10xf32> to vector<10x10xf32>
    %c0_24 = arith.constant 0 : index
    %c0_25 = arith.constant 0 : index
    %c20 = arith.constant 20 : index
    %24 = vector.load %arg1[%c0_24, %c0_25, %c20] : memref<1x10x512xf32, #tpu.memory_space<vmem>>, vector<1x10x384xf32>
    %25 = vector.shape_cast %24 : vector<1x10x384xf32> to vector<10x384xf32>
    %cst_26 = arith.constant dense<0.000000e+00> : vector<10x384xf32>
    %26 = tpu.matmul %23, %25, %cst_26 {dimension_numbers = #tpu.dot_dimension_numbers<[1], [0], [0], [1], [0, 0, 1, 1], [], []>} : vector<10x10xf32>, vector<10x384xf32>, vector<10x384xf32> -> vector<10x384xf32>
    %27 = arith.addf %21, %26 : vector<10x384xf32>
    %c4 = arith.constant 4 : index
    %c0_27 = arith.constant 0 : index
    %c0_28 = arith.constant 0 : index
    %28 = vector.load %arg2[%c4, %c0_27, %c0_28] : memref<9x10x10xf32, #tpu.memory_space<vmem>>, vector<1x10x10xf32>
    %29 = vector.shape_cast %28 : vector<1x10x10xf32> to vector<10x10xf32>
    %c0_29 = arith.constant 0 : index
    %c0_30 = arith.constant 0 : index
    %c21 = arith.constant 21 : index
    %30 = vector.load %arg1[%c0_29, %c0_30, %c21] : memref<1x10x512xf32, #tpu.memory_space<vmem>>, vector<1x10x384xf32>
    %31 = vector.shape_cast %30 : vector<1x10x384xf32> to vector<10x384xf32>
    %cst_31 = arith.constant dense<0.000000e+00> : vector<10x384xf32>
    %32 = tpu.matmul %29, %31, %cst_31 {dimension_numbers = #tpu.dot_dimension_numbers<[1], [0], [0], [1], [0, 0, 1, 1], [], []>} : vector<10x10xf32>, vector<10x384xf32>, vector<10x384xf32> -> vector<10x384xf32>
    %33 = arith.addf %27, %32 : vector<10x384xf32>
    %c5 = arith.constant 5 : index
    %c0_32 = arith.constant 0 : index
    %c0_33 = arith.constant 0 : index
    %34 = vector.load %arg2[%c5, %c0_32, %c0_33] : memref<9x10x10xf32, #tpu.memory_space<vmem>>, vector<1x10x10xf32>
    %35 = vector.shape_cast %34 : vector<1x10x10xf32> to vector<10x10xf32>
    %c0_34 = arith.constant 0 : index
    %c0_35 = arith.constant 0 : index
    %c22 = arith.constant 22 : index
    %36 = vector.load %arg1[%c0_34, %c0_35, %c22] : memref<1x10x512xf32, #tpu.memory_space<vmem>>, vector<1x10x384xf32>
    %37 = vector.shape_cast %36 : vector<1x10x384xf32> to vector<10x384xf32>
    %cst_36 = arith.constant dense<0.000000e+00> : vector<10x384xf32>
    %38 = tpu.matmul %35, %37, %cst_36 {dimension_numbers = #tpu.dot_dimension_numbers<[1], [0], [0], [1], [0, 0, 1, 1], [], []>} : vector<10x10xf32>, vector<10x384xf32>, vector<10x384xf32> -> vector<10x384xf32>
    %39 = arith.addf %33, %38 : vector<10x384xf32>
    %c6 = arith.constant 6 : index
    %c0_37 = arith.constant 0 : index
    %c0_38 = arith.constant 0 : index
    %40 = vector.load %arg2[%c6, %c0_37, %c0_38] : memref<9x10x10xf32, #tpu.memory_space<vmem>>, vector<1x10x10xf32>
    %41 = vector.shape_cast %40 : vector<1x10x10xf32> to vector<10x10xf32>
    %c0_39 = arith.constant 0 : index
    %c0_40 = arith.constant 0 : index
    %c40 = arith.constant 40 : index
    %42 = vector.load %arg1[%c0_39, %c0_40, %c40] : memref<1x10x512xf32, #tpu.memory_space<vmem>>, vector<1x10x384xf32>
    %43 = vector.shape_cast %42 : vector<1x10x384xf32> to vector<10x384xf32>
    %cst_41 = arith.constant dense<0.000000e+00> : vector<10x384xf32>
    %44 = tpu.matmul %41, %43, %cst_41 {dimension_numbers = #tpu.dot_dimension_numbers<[1], [0], [0], [1], [0, 0, 1, 1], [], []>} : vector<10x10xf32>, vector<10x384xf32>, vector<10x384xf32> -> vector<10x384xf32>
    %45 = arith.addf %39, %44 : vector<10x384xf32>
    %c7 = arith.constant 7 : index
    %c0_42 = arith.constant 0 : index
    %c0_43 = arith.constant 0 : index
    %46 = vector.load %arg2[%c7, %c0_42, %c0_43] : memref<9x10x10xf32, #tpu.memory_space<vmem>>, vector<1x10x10xf32>
    %47 = vector.shape_cast %46 : vector<1x10x10xf32> to vector<10x10xf32>
    %c0_44 = arith.constant 0 : index
    %c0_45 = arith.constant 0 : index
    %c41 = arith.constant 41 : index
    %48 = vector.load %arg1[%c0_44, %c0_45, %c41] : memref<1x10x512xf32, #tpu.memory_space<vmem>>, vector<1x10x384xf32>
    %49 = vector.shape_cast %48 : vector<1x10x384xf32> to vector<10x384xf32>
    %cst_46 = arith.constant dense<0.000000e+00> : vector<10x384xf32>
    %50 = tpu.matmul %47, %49, %cst_46 {dimension_numbers = #tpu.dot_dimension_numbers<[1], [0], [0], [1], [0, 0, 1, 1], [], []>} : vector<10x10xf32>, vector<10x384xf32>, vector<10x384xf32> -> vector<10x384xf32>
    %51 = arith.addf %45, %50 : vector<10x384xf32>
    %c8 = arith.constant 8 : index
    %c0_47 = arith.constant 0 : index
    %c0_48 = arith.constant 0 : index
    %52 = vector.load %arg2[%c8, %c0_47, %c0_48] : memref<9x10x10xf32, #tpu.memory_space<vmem>>, vector<1x10x10xf32>
    %53 = vector.shape_cast %52 : vector<1x10x10xf32> to vector<10x10xf32>
    %c0_49 = arith.constant 0 : index
    %c0_50 = arith.constant 0 : index
    %c42 = arith.constant 42 : index
    %54 = vector.load %arg1[%c0_49, %c0_50, %c42] : memref<1x10x512xf32, #tpu.memory_space<vmem>>, vector<1x10x384xf32>
    %55 = vector.shape_cast %54 : vector<1x10x384xf32> to vector<10x384xf32>
    %cst_51 = arith.constant dense<0.000000e+00> : vector<10x384xf32>
    %56 = tpu.matmul %53, %55, %cst_51 {dimension_numbers = #tpu.dot_dimension_numbers<[1], [0], [0], [1], [0, 0, 1, 1], [], []>} : vector<10x10xf32>, vector<10x384xf32>, vector<10x384xf32> -> vector<10x384xf32>
    %57 = arith.addf %51, %56 : vector<10x384xf32>
    %c0_52 = arith.constant 0 : index
    %c0_53 = arith.constant 0 : index
    %c0_54 = arith.constant 0 : index
    %58 = vector.load %arg4[%c0_52, %c0_53, %c0_54] : memref<1x10x384xf32, #tpu.memory_space<vmem>>, vector<1x10x384xf32>
    %59 = vector.shape_cast %58 : vector<1x10x384xf32> to vector<10x384xf32>
    %60 = vector.shape_cast %57 : vector<10x384xf32> to vector<1x10x384xf32>
    tpu.vector_store %arg4[%c0_52, %c0_53, %c0_54], %60 {strides = array<i32>} : memref<1x10x384xf32, #tpu.memory_space<vmem>>, vector<1x10x384xf32>,
    %61 = vector.broadcast %0 : vector<1x384xf32> to vector<10x384xf32>
    %62 = arith.mulf %57, %61 : vector<10x384xf32>
    %cst_55 = arith.constant dense<0.000000e+00> : vector<10xf32>
    %63 = vector.multi_reduction <add>, %62, %cst_55 [1] : vector<10x384xf32> to vector<10xf32>
    %64 = vector.shape_cast %63 : vector<10xf32> to vector<10x1xf32>
    %65 = arith.addf %1, %64 : vector<10x1xf32>
    %66 = arith.mulf %62, %57 : vector<10x384xf32>
    %cst_56 = arith.constant dense<0.000000e+00> : vector<10xf32>
    %67 = vector.multi_reduction <add>, %66, %cst_56 [1] : vector<10x384xf32> to vector<10xf32>
    %68 = vector.shape_cast %67 : vector<10xf32> to vector<10x1xf32>
    %69 = arith.addf %2, %68 : vector<10x1xf32>
    %70 = tpu.iota {dimensions = array<i32: 1>} : vector<10x128xi32>
    %c0_i32 = arith.constant 0 : i32
    %71 = vector.broadcast %c0_i32 : i32 to vector<10x128xi32>
    %72 = arith.cmpi eq, %70, %71 : vector<10x128xi32>
    %c1_i32 = arith.constant 1 : i32
    %73 = vector.broadcast %c1_i32 : i32 to vector<10x128xi32>
    %74 = arith.cmpi eq, %70, %73 : vector<10x128xi32>
    %cst_57 = arith.constant 0.000000e+00 : f32
    %75 = vector.shape_cast %69 : vector<10x1xf32> to vector<10x1xf32>
    %76 = vector.broadcast %75 : vector<10x1xf32> to vector<10x128xf32>
    %77 = vector.broadcast %cst_57 : f32 to vector<10x128xf32>
    %78 = arith.select %74, %76, %77 : vector<10x128xi1>, vector<10x128xf32>
    %79 = vector.shape_cast %65 : vector<10x1xf32> to vector<10x1xf32>
    %80 = vector.broadcast %79 : vector<10x1xf32> to vector<10x128xf32>
    %81 = arith.select %72, %80, %78 : vector<10x128xi1>, vector<10x128xf32>
    %c0_58 = arith.constant 0 : index
    %c0_59 = arith.constant 0 : index
    %c0_60 = arith.constant 0 : index
    %82 = vector.load %arg5[%c0_58, %c0_59, %c0_60] : memref<1x10x128xf32, #tpu.memory_space<vmem>>, vector<1x10x128xf32>
    %83 = vector.shape_cast %82 : vector<1x10x128xf32> to vector<10x128xf32>
    %84 = vector.shape_cast %81 : vector<10x128xf32> to vector<1x10x128xf32>
    tpu.vector_store %arg5[%c0_58, %c0_59, %c0_60], %84 {strides = array<i32>} : memref<1x10x128xf32, #tpu.memory_space<vmem>>, vector<1x10x128xf32>,
    return
  }
  func.func @transform_0(%arg0: i32) -> (i32, i32, i32) {
    %c0_i32 = arith.constant 0 : i32
    %c0_i32_0 = arith.constant 0 : i32
    %c0_i32_1 = arith.constant 0 : i32
    return %arg0, %c0_i32, %c0_i32_0 : i32, i32, i32
  }
  func.func @transform_1(%arg0: i32) -> (i32, i32, i32) {
    %c0_i32 = arith.constant 0 : i32
    %c0_i32_0 = arith.constant 0 : i32
    %c0_i32_1 = arith.constant 0 : i32
    %c0_i32_2 = arith.constant 0 : i32
    return %c0_i32, %c0_i32_0, %c0_i32_1 : i32, i32, i32
  }
  func.func @transform_2(%arg0: i32) -> (i32, i32) {
    %c0_i32 = arith.constant 0 : i32
    %c0_i32_0 = arith.constant 0 : i32
    %c0_i32_1 = arith.constant 0 : i32
    return %c0_i32, %c0_i32_0 : i32, i32
  }
  func.func @transform_3(%arg0: i32) -> (i32, i32, i32) {
    %c0_i32 = arith.constant 0 : i32
    %c0_i32_0 = arith.constant 0 : i32
    %c0_i32_1 = arith.constant 0 : i32
    return %arg0, %c0_i32, %c0_i32_0 : i32, i32, i32
  }
  func.func @transform_4(%arg0: i32) -> (i32, i32, i32) {
    %c0_i32 = arith.constant 0 : i32
    %c0_i32_0 = arith.constant 0 : i32
    %c0_i32_1 = arith.constant 0 : i32
    return %arg0, %c0_i32, %c0_i32_0 : i32, i32, i32
  }
}

</mosaic_0001>

<llo_original>
// kernel: bn_after_conv_transpose2d.1
$region0: #{bn_after_conv_transpose2d.1}
  #allocation0 [shape = 'u32[]', space=smem, size = 0x4, offset = 0x4, fixed_abs, tag = 'smem constant byte address 0x4 - core index']
  #allocation1 [shape = 'u32[144,128]{1,0:T(1,128)}', space=vmem, size = 0x12000, scoped, tag = 'internal scratch']
  %s0 = inlined_call_operand.vmem [shape: f32[2,10,512], index: 0, kind: input, shape index: {}]
  %s1 = inlined_call_operand.vmem [shape: f32[9,10,10], index: 1, kind: input, shape index: {}]
  %s2 = inlined_call_operand.vmem [shape: f32[1,384], index: 2, kind: input, shape index: {}]
  %s3 = inlined_call_operand.vmem [shape: f32[2,10,384], index: 3, kind: output, shape index: {0}]
  %s4 = inlined_call_operand.vmem [shape: f32[2,10,128], index: 4, kind: output, shape index: {1}]
  %5 = xla_tuple %s3, %s4
  %s6 = sld [smem:[#allocation0]]
  $region53: #{bn_after_conv_transpose2d.1} parent=0
    _
  %s8 = ssub.s32 1, %s6
  %s9 = scalar_select 0, %s8, %s6
  loop: start=0, step=1, limit=4
  $region2: #{bn_after_conv_transpose2d.1} parent=0 // loop_pre_header
    _
  $region3: #{bn_after_conv_transpose2d.1} parent=0 // loop_header
    %s11 = sphi 0, %s15
    %p12 = scmp.ge.s32.totalorder %s11, 4
    %s21 = sphi 0, %s23
    %s24 = sphi 0, %s21
    %s25 = sphi 0, %s24
    %s41 = sphi 0, %s25
    %s45 = sphi 0, %s45
    %s47 = sphi 0, %s45
    %s48 = sphi 0, %s47
    %s62 = sphi 0, %s48
    %s66 = sphi 0, %s66
    %s68 = sphi 0, %s66
    %s69 = sphi 0, %s68
    %s83 = sphi 0, %s69
    %s89 = sphi 0, %s91
    %s92 = sphi 0, %s89
    %s93 = sphi 0, %s92
    %s109 = sphi 0, %s93
    %s115 = sphi 0, %s117
    %s118 = sphi 0, %s115
    %s119 = sphi 0, %s118
    %s135 = sphi 0, %s119
  $region4: #{bn_after_conv_transpose2d.1} parent=0 // loop_header_branch
    %14 = sbr.rel (%p12) target = $region8
  $region5: #{bn_after_conv_transpose2d.1} parent=0 // loop_body
    %s16 = ssub.s32 %s11, 1
    %s17 = ssub.s32 %s11, 2
    %s18 = sadd.s32 %s11, 1
    %s19 = ssub.s32 %s11, %s18
    %p20 = scmp.eq.s32.totalorder %s19, 0
    %s22 = sadd.s32 %s21, 1
    %s23 = scalar_select %p20, %s21, %s22
    %p26 = pneg %p20
    %p27 = scmp.eq.s32.totalorder %s11, 1
    %p28 = por %p26, %p27
    %p29 = scmp.ne.s32.totalorder %s21, %s24
    %p30 = scmp.eq.s32.totalorder %s11, 0
    %p31 = por %p29, %p30
    %p32 = scmp.ne.s32.totalorder %s21, %s24
    %p33 = scmp.eq.s32.totalorder %s16, 1
    %p34 = por %p32, %p33
    %p35 = scmp.ne.s32.totalorder %s24, %s25
    %p36 = scmp.eq.s32.totalorder %s16, 0
    %p37 = por %p35, %p36
    %p38 = scmp.ne.s32.totalorder %s24, %s25
    %p39 = scmp.eq.s32.totalorder %s17, 1
    %p40 = por %p38, %p39
    %p42 = scmp.ne.s32.totalorder %s25, %s41
    %p43 = scmp.eq.s32.totalorder %s17, 0
    %p44 = por %p42, %p43
    %s46 = sadd.s32 %s45, 1
    %p49 = scmp.eq.s32.totalorder %s11, 1
    %p50 = scmp.ne.s32.totalorder %s45, %s47
    %p51 = scmp.eq.s32.totalorder %s11, 0
    %p52 = por %p50, %p51
    %p53 = scmp.ne.s32.totalorder %s45, %s47
    %p54 = scmp.eq.s32.totalorder %s16, 1
    %p55 = por %p53, %p54
    %p56 = scmp.ne.s32.totalorder %s47, %s48
    %p57 = scmp.eq.s32.totalorder %s16, 0
    %p58 = por %p56, %p57
    %p59 = scmp.ne.s32.totalorder %s47, %s48
    %p60 = scmp.eq.s32.totalorder %s17, 1
    %p61 = por %p59, %p60
    %p63 = scmp.ne.s32.totalorder %s48, %s62
    %p64 = scmp.eq.s32.totalorder %s17, 0
    %p65 = por %p63, %p64
    %s67 = sadd.s32 %s66, 1
    %p70 = scmp.eq.s32.totalorder %s11, 1
    %p71 = scmp.ne.s32.totalorder %s66, %s68
    %p72 = scmp.eq.s32.totalorder %s11, 0
    %p73 = por %p71, %p72
    %p74 = scmp.ne.s32.totalorder %s66, %s68
    %p75 = scmp.eq.s32.totalorder %s16, 1
    %p76 = por %p74, %p75
    %p77 = scmp.ne.s32.totalorder %s68, %s69
    %p78 = scmp.eq.s32.totalorder %s16, 0
    %p79 = por %p77, %p78
    %p80 = scmp.ne.s32.totalorder %s68, %s69
    %p81 = scmp.eq.s32.totalorder %s17, 1
    %p82 = por %p80, %p81
    %p84 = scmp.ne.s32.totalorder %s69, %s83
    %p85 = scmp.eq.s32.totalorder %s17, 0
    %p86 = por %p84, %p85
    %s87 = ssub.s32 %s11, %s18
    %p88 = scmp.eq.s32.totalorder %s87, 0
    %s90 = sadd.s32 %s89, 1
    %s91 = scalar_select %p88, %s89, %s90
    %p94 = pneg %p88
    %p95 = scmp.eq.s32.totalorder %s11, 1
    %p96 = por %p94, %p95
    %p97 = scmp.ne.s32.totalorder %s89, %s92
    %p98 = scmp.eq.s32.totalorder %s11, 0
    %p99 = por %p97, %p98
    %p100 = scmp.ne.s32.totalorder %s89, %s92
    %p101 = scmp.eq.s32.totalorder %s16, 1
    %p102 = por %p100, %p101
    %p103 = scmp.ne.s32.totalorder %s92, %s93
    %p104 = scmp.eq.s32.totalorder %s16, 0
    %p105 = por %p103, %p104
    %p106 = scmp.ne.s32.totalorder %s92, %s93
    %p107 = scmp.eq.s32.totalorder %s17, 1
    %p108 = por %p106, %p107
    %p110 = scmp.ne.s32.totalorder %s93, %s109
    %p111 = scmp.eq.s32.totalorder %s17, 0
    %p112 = por %p110, %p111
    %s113 = ssub.s32 %s11, %s18
    %p114 = scmp.eq.s32.totalorder %s113, 0
    %s116 = sadd.s32 %s115, 1
    %s117 = scalar_select %p114, %s115, %s116
    %p120 = pneg %p114
    %p121 = scmp.eq.s32.totalorder %s11, 1
    %p122 = por %p120, %p121
    %p123 = scmp.ne.s32.totalorder %s115, %s118
    %p124 = scmp.eq.s32.totalorder %s11, 0
    %p125 = por %p123, %p124
    %p126 = scmp.ne.s32.totalorder %s115, %s118
    %p127 = scmp.eq.s32.totalorder %s16, 1
    %p128 = por %p126, %p127
    %p129 = scmp.ne.s32.totalorder %s118, %s119
    %p130 = scmp.eq.s32.totalorder %s16, 0
    %p131 = por %p129, %p130
    %p132 = scmp.ne.s32.totalorder %s118, %s119
    %p133 = scmp.eq.s32.totalorder %s17, 1
    %p134 = por %p132, %p133
    %p136 = scmp.ne.s32.totalorder %s119, %s135
    %p137 = scmp.eq.s32.totalorder %s17, 0
    %p138 = por %p136, %p137
    %p139 = scmp.le.s32.totalorder 1, %s11
    %p140 = scmp.lt.s32.totalorder %s11, 3
    %p141 = pnand %p139, %p140
    %p142 = pneg %p141
    // Predicated region
    $region9: #{bn_after_conv_transpose2d.1} parent=5 // pred_check
      _
    $region10: #{bn_after_conv_transpose2d.1} parent=5 // pred_check_branch
      %144 = sbr.rel (%p141) target = $region12
    $region11: #{bn_after_conv_transpose2d.1} parent=5 // pred_region
      %s145 = ssub.s32 %s11, 1
      // Predicated region
      $region13: #{bn_after_conv_transpose2d.1} parent=11 // pred_check
        %p146 = pneg %p58
      $region14: #{bn_after_conv_transpose2d.1} parent=11 // pred_check_branch
        %148 = sbr.rel (%p146) target = $region16
      $region15: #{bn_after_conv_transpose2d.1} parent=11 // pred_region
        _
      $region16: #{bn_after_conv_transpose2d.1} parent=11 // pred_fallthru
        _
      // Predicated region
      $region17: #{bn_after_conv_transpose2d.1} parent=11 // pred_check
        %p149 = pneg %p79
      $region18: #{bn_after_conv_transpose2d.1} parent=11 // pred_check_branch
        %151 = sbr.rel (%p149) target = $region20
      $region19: #{bn_after_conv_transpose2d.1} parent=11 // pred_region
        _
      $region20: #{bn_after_conv_transpose2d.1} parent=11 // pred_fallthru
        _
    $region12: #{bn_after_conv_transpose2d.1} parent=5 // pred_fallthru
      _
    %p152 = scmp.lt.s32.totalorder %s11, 2
    // Predicated region
    $region21: #{bn_after_conv_transpose2d.1} parent=5 // pred_check
      %p153 = pneg %p152
    $region22: #{bn_after_conv_transpose2d.1} parent=5 // pred_check_branch
      %155 = sbr.rel (%p153) target = $region24
    $region23: #{bn_after_conv_transpose2d.1} parent=5 // pred_region
      // Predicated region
      $region25: #{bn_after_conv_transpose2d.1} parent=23 // pred_check
        %p156 = pneg %p31
      $region26: #{bn_after_conv_transpose2d.1} parent=23 // pred_check_branch
        %158 = sbr.rel (%p156) target = $region28
      $region27: #{bn_after_conv_transpose2d.1} parent=23 // pred_region
        %p159 = scmp.lt.s32.totalorder %s11, 1
        %s160 = scalar_select %p159, %s11, 1
        %s161 = smul.addr %s160, 8
        %s162 = smul.addr %s161, 8
        %s163 = scalar_lea.vmem %s0, %s162
      $region28: #{bn_after_conv_transpose2d.1} parent=23 // pred_fallthru
        _
    $region24: #{bn_after_conv_transpose2d.1} parent=5 // pred_fallthru
      _
    %p164 = scmp.le.s32.totalorder 1, %s11
    %p165 = scmp.lt.s32.totalorder %s11, 3
    %p166 = pnand %p164, %p165
    %p167 = pneg %p166
    // Predicated region
    $region29: #{bn_after_conv_transpose2d.1} parent=5 // pred_check
      _
    $region30: #{bn_after_conv_transpose2d.1} parent=5 // pred_check_branch
      %169 = sbr.rel (%p166) target = $region32
    $region31: #{bn_after_conv_transpose2d.1} parent=5 // pred_region
      %s170 = ssub.s32 %s11, 1
      %p171 = scmp.lt.s32.totalorder %s16, 1
      %s172 = scalar_select %p171, %s16, 1
      %s173 = smul.addr %s172, 8
      %s174 = smul.addr %s173, 8
      %s175 = scalar_lea.vmem %s0, %s174
      %p176 = pneg %p37
      %p177 = pneg %p34
      %p178 = pneg %p58
      %p179 = pneg %p55
      %p180 = pneg %p79
      %p181 = pneg %p76
      %p182 = pneg %p105
      %p183 = pneg %p102
      %p184 = scmp.lt.s32.totalorder %s16, 1
      %s185 = scalar_select %p184, %s16, 1
      %s186 = smul.addr %s185, 6
      %s187 = smul.addr %s186, 8
      %s188 = scalar_lea.vmem %s3, %s187
      %p189 = pneg %p131
      %p190 = pneg %p128
      %p191 = scmp.lt.s32.totalorder %s16, 1
      %s192 = scalar_select %p191, %s16, 1
      %s193 = smul.addr %s192, 2
      %s194 = smul.addr %s193, 8
      %s195 = scalar_lea.vmem %s4, %s194
      %p196 = scmp.lt.s32.totalorder %s16, 1
      %s197 = scalar_select %p196, %s16, 1
      %s198 = smul.addr %s197, 8
      %s199 = smul.addr %s198, 8
      %s200 = scalar_lea.vmem %s0, %s199
      %p201 = scmp.lt.s32.totalorder %s16, 1
      %s202 = scalar_select %p201, %s16, 1
      %s203 = smul.addr %s202, 6
      %s204 = smul.addr %s203, 8
      %s205 = scalar_lea.vmem %s3, %s204
      %p206 = scmp.lt.s32.totalorder %s16, 1
      %s207 = scalar_select %p206, %s16, 1
      %s208 = smul.addr %s207, 2
      %s209 = smul.addr %s208, 8
      %s210 = scalar_lea.vmem %s4, %s209
      %v211 = vld [vmem:[%s2] sm:$0x7]
      %v212 = vld [vmem:[%s1] sm:$0xff]
      %v213 = vld [vmem:[%s1 + $0x8] sm:$0x3]
      %v214 = vld [vmem:[%s200] sm:$0xff]
      %v215 = vld [vmem:[%s200 + $0x8] sm:$0xff]
      %v216 = vld [vmem:[%s200 + $0x10] sm:$0xff]
      %v217 = vld [vmem:[%s200 + $0x20] sm:$0x3]
      %v218 = vld [vmem:[%s200 + $0x28] sm:$0x3]
      %v219 = vld [vmem:[%s200 + $0x30] sm:$0x3]
      %s220 = scalar_lea.vmem %s1, 16
      %v221 = vld [vmem:[%s220] sm:$0xff]
      %v222 = vld [vmem:[%s220 + $0x8] sm:$0x3]
      %v223 = vld [vmem:[%s200 + $0x18] sm:$0xff]
      %v224 = vld [vmem:[%s200 + $0x38] sm:$0x3]
      %233 = vrot.lane.b32.xlu0 %v214, 127
      %v234 = vpop.permute.xlu0 %233
      %235 = vrot.lane.b32.xlu0 %v215, 127
      %v236 = vpop.permute.xlu0 %235
      %237 = vrot.lane.b32.xlu0 %v216, 127
      %v238 = vpop.permute.xlu0 %237
      %239 = vrot.lane.b32.xlu0 %v223, 127
      %v240 = vpop.permute.xlu0 %239
      %241 = vrot.lane.b32.xlu0 %v217, 127
      %v242 = vpop.permute.xlu0 %241
      %243 = vrot.lane.b32.xlu0 %v218, 127
      %v244 = vpop.permute.xlu0 %243
      %245 = vrot.lane.b32.xlu0 %v219, 127
      %v246 = vpop.permute.xlu0 %245
      %247 = vrot.lane.b32.xlu0 %v224, 127
      %v248 = vpop.permute.xlu0 %247
      %vm249 = vcmask 1039360
      %v250 = vsel %vm249, %v234, %v236
      %v251 = vsel %vm249, %v236, %v238
      %v252 = vsel %vm249, %v238, %v240
      %v253 = vsel %vm249, %v242, %v244
      %v254 = vsel %vm249, %v244, %v246
      %v255 = vsel %vm249, %v246, %v248
      %vm259 = vcmask 80896
      %v261 = vsel %vm259, %v221, 0
      %v264 = vsel %vm259, %v222, 0
      %vm266 = vcmask 1041408
      %v267 = vsel %vm266, %v253, 0
      %v269 = vsel %vm266, %v254, 0
      %v271 = vsel %vm266, %v255, 0
      %273 = vmatprep.subr.mxu0 0.0
      %274 = vmatpush1.msra.mxu0 0.0
      %275 = vmatprep.subr.mxu0 0.0
      %276 = vmatpush1.msra.mxu0 0.0
      %277 = vmatprep.subr.mxu0 0.0
      %278 = vmatpush1.msra.mxu0 0.0
      %279 = vmatprep.subr.mxu0 0.0
      %280 = vmatpush1.msra.mxu0 0.0
      %281 = vmatprep.subr.mxu0 0.0
      %282 = vmatpush1.msra.mxu0 0.0
      %283 = vmatprep.subr.mxu0 0.0
      %284 = vmatpush1.msra.mxu0 0.0
      %285 = vmatprep.subr.mxu0 0.0
      %286 = vmatpush1.msra.mxu0 0.0
      %287 = vmatprep.subr.mxu0 0.0
      %288 = vmatpush1.msra.mxu0 0.0
      %289 = vmatprep.subr.mxu0 0.0
      %290 = vmatpush1.msra.mxu0 0.0
      %291 = vmatprep.subr.mxu0 0.0
      %292 = vmatpush1.msra.mxu0 0.0
      %293 = vmatprep.subr.mxu0 0.0
      %294 = vmatpush1.msra.mxu0 0.0
      %295 = vmatprep.subr.mxu0 0.0
      %296 = vmatpush1.msra.mxu0 0.0
      %297 = vmatprep.subr.mxu0 0.0
      %298 = vmatpush1.msra.mxu0 0.0
      %299 = vmatprep.subr.mxu0 0.0
      %300 = vmatpush1.msra.mxu0 0.0
      %301 = vmatprep.subr.mxu0 %v269
      %302 = vmatpush1.msra.mxu0 %v267
      %303 = vmatprep.subr.mxu0 %v251
      %304 = vmatpush1.msra.mxu0 %v250
      %305 = vmatprep.subr.mxu0 0.0
      %306 = vmatpush2.msra.mxu0 0.0
      %307 = vmatprep.subr.mxu0 0.0
      %308 = vmatpush2.msra.mxu0 0.0
      %309 = vmatprep.subr.mxu0 0.0
      %310 = vmatpush2.msra.mxu0 0.0
      %311 = vmatprep.subr.mxu0 0.0
      %312 = vmatpush2.msra.mxu0 0.0
      %313 = vmatprep.subr.mxu0 0.0
      %314 = vmatpush2.msra.mxu0 0.0
      %315 = vmatprep.subr.mxu0 0.0
      %316 = vmatpush2.msra.mxu0 0.0
      %317 = vmatprep.subr.mxu0 0.0
      %318 = vmatpush2.msra.mxu0 0.0
      %319 = vmatprep.subr.mxu0 0.0
      %320 = vmatpush2.msra.mxu0 0.0
      %321 = vmatprep.subr.mxu0 0.0
      %322 = vmatpush2.msra.mxu0 0.0
      %323 = vmatprep.subr.mxu0 0.0
      %324 = vmatpush2.msra.mxu0 0.0
      %325 = vmatprep.subr.mxu0 0.0
      %326 = vmatpush2.msra.mxu0 0.0
      %327 = vmatprep.subr.mxu0 0.0
      %328 = vmatpush2.msra.mxu0 0.0
      %329 = vmatprep.subr.mxu0 0.0
      %330 = vmatpush2.msra.mxu0 0.0
      %331 = vmatprep.subr.mxu0 0.0
      %332 = vmatpush2.msra.mxu0 0.0
      %333 = vmatprep.subr.mxu0 0.0
      %334 = vmatpush2.msra.mxu0 0.0
      %335 = vmatprep.subr.mxu0 0.0
      %336 = vmatpush2.msra.mxu0 0.0
      %337 = vmatprep.mubr.f32.mxu0 0.0
      %338 = vmatmul.mubr.f32.gmra.mxu0 %v261
      %v339 = vpop.f32.mrf.mxu0
      %v340 = vadd.f32 0.0, %v339
      %v341 = vpop.f32.mrf.mxu0
      %v342 = vadd.f32 0.0, %v341
      %343 = vmatprep.mubr.f32.mxu0 0.0
      %344 = vmatmul.mubr.f32.gmra.mxu0 %v264
      %v345 = vpop.f32.mrf.mxu0
      %v346 = vadd.f32 0.0, %v345
      %v347 = vpop.f32.mrf.mxu0
      %v348 = vadd.f32 0.0, %v347
      %349 = vdwg.mxu0
      %350 = vmatprep.subr.mxu0 0.0
      %351 = vmatpush1.msra.mxu0 0.0
      %352 = vmatprep.subr.mxu0 0.0
      %353 = vmatpush1.msra.mxu0 0.0
      %354 = vmatprep.subr.mxu0 0.0
      %355 = vmatpush1.msra.mxu0 0.0
      %356 = vmatprep.subr.mxu0 0.0
      %357 = vmatpush1.msra.mxu0 0.0
      %358 = vmatprep.subr.mxu0 0.0
      %359 = vmatpush1.msra.mxu0 0.0
      %360 = vmatprep.subr.mxu0 0.0
      %361 = vmatpush1.msra.mxu0 0.0
      %362 = vmatprep.subr.mxu0 0.0
      %363 = vmatpush1.msra.mxu0 0.0
      %364 = vmatprep.subr.mxu0 0.0
      %365 = vmatpush1.msra.mxu0 0.0
      %366 = vmatprep.subr.mxu0 0.0
      %367 = vmatpush1.msra.mxu0 0.0
      %368 = vmatprep.subr.mxu0 0.0
      %369 = vmatpush1.msra.mxu0 0.0
      %370 = vmatprep.subr.mxu0 0.0
      %371 = vmatpush1.msra.mxu0 0.0
      %372 = vmatprep.subr.mxu0 0.0
      %373 = vmatpush1.msra.mxu0 0.0
      %374 = vmatprep.subr.mxu0 0.0
      %375 = vmatpush1.msra.mxu0 0.0
      %376 = vmatprep.subr.mxu0 0.0
      %377 = vmatpush1.msra.mxu0 0.0
      %378 = vmatprep.subr.mxu0 0.0
      %379 = vmatpush1.msra.mxu0 %v271
      %380 = vmatprep.subr.mxu0 0.0
      %381 = vmatpush1.msra.mxu0 %v252
      %382 = vmatprep.subr.mxu0 0.0
      %383 = vmatpush2.msra.mxu0 0.0
      %384 = vmatprep.subr.mxu0 0.0
      %385 = vmatpush2.msra.mxu0 0.0
      %386 = vmatprep.subr.mxu0 0.0
      %387 = vmatpush2.msra.mxu0 0.0
      %388 = vmatprep.subr.mxu0 0.0
      %389 = vmatpush2.msra.mxu0 0.0
      %390 = vmatprep.subr.mxu0 0.0
      %391 = vmatpush2.msra.mxu0 0.0
      %392 = vmatprep.subr.mxu0 0.0
      %393 = vmatpush2.msra.mxu0 0.0
      %394 = vmatprep.subr.mxu0 0.0
      %395 = vmatpush2.msra.mxu0 0.0
      %396 = vmatprep.subr.mxu0 0.0
      %397 = vmatpush2.msra.mxu0 0.0
      %398 = vmatprep.subr.mxu0 0.0
      %399 = vmatpush2.msra.mxu0 0.0
      %400 = vmatprep.subr.mxu0 0.0
      %401 = vmatpush2.msra.mxu0 0.0
      %402 = vmatprep.subr.mxu0 0.0
      %403 = vmatpush2.msra.mxu0 0.0
      %404 = vmatprep.subr.mxu0 0.0
      %405 = vmatpush2.msra.mxu0 0.0
      %406 = vmatprep.subr.mxu0 0.0
      %407 = vmatpush2.msra.mxu0 0.0
      %408 = vmatprep.subr.mxu0 0.0
      %409 = vmatpush2.msra.mxu0 0.0
      %410 = vmatprep.subr.mxu0 0.0
      %411 = vmatpush2.msra.mxu0 0.0
      %412 = vmatprep.subr.mxu0 0.0
      %413 = vmatpush2.msra.mxu0 0.0
      %414 = vmatprep.mubr.f32.mxu0 0.0
      %415 = vmatmul.mubr.f32.gmra.mxu0 %v261
      %v416 = vpop.f32.mrf.mxu0
      %v417 = vadd.f32 0.0, %v416
      %v418 = vpop.f32.mrf.mxu0
      %419 = vmatprep.mubr.f32.mxu0 0.0
      %420 = vmatmul.mubr.f32.gmra.mxu0 %v264
      %v421 = vpop.f32.mrf.mxu0
      %v422 = vadd.f32 0.0, %v421
      %v423 = vpop.f32.mrf.mxu0
      %424 = vdwg.mxu0
      %v426 = vsel %vm259, %v212, 0
      %v429 = vsel %vm259, %v213, 0
      %v431 = vsel %vm266, %v217, 0
      %v433 = vsel %vm266, %v218, 0
      %v435 = vsel %vm266, %v219, 0
      %437 = vmatprep.subr.mxu0 0.0
      %438 = vmatpush1.msra.mxu0 0.0
      %439 = vmatprep.subr.mxu0 0.0
      %440 = vmatpush1.msra.mxu0 0.0
      %441 = vmatprep.subr.mxu0 0.0
      %442 = vmatpush1.msra.mxu0 0.0
      %443 = vmatprep.subr.mxu0 0.0
      %444 = vmatpush1.msra.mxu0 0.0
      %445 = vmatprep.subr.mxu0 0.0
      %446 = vmatpush1.msra.mxu0 0.0
      %447 = vmatprep.subr.mxu0 0.0
      %448 = vmatpush1.msra.mxu0 0.0
      %449 = vmatprep.subr.mxu0 0.0
      %450 = vmatpush1.msra.mxu0 0.0
      %451 = vmatprep.subr.mxu0 0.0
      %452 = vmatpush1.msra.mxu0 0.0
      %453 = vmatprep.subr.mxu0 0.0
      %454 = vmatpush1.msra.mxu0 0.0
      %455 = vmatprep.subr.mxu0 0.0
      %456 = vmatpush1.msra.mxu0 0.0
      %457 = vmatprep.subr.mxu0 0.0
      %458 = vmatpush1.msra.mxu0 0.0
      %459 = vmatprep.subr.mxu0 0.0
      %460 = vmatpush1.msra.mxu0 0.0
      %461 = vmatprep.subr.mxu0 0.0
      %462 = vmatpush1.msra.mxu0 0.0
      %463 = vmatprep.subr.mxu0 0.0
      %464 = vmatpush1.msra.mxu0 0.0
      %465 = vmatprep.subr.mxu0 %v433
      %466 = vmatpush1.msra.mxu0 %v431
      %467 = vmatprep.subr.mxu0 %v215
      %468 = vmatpush1.msra.mxu0 %v214
      %469 = vmatprep.subr.mxu0 0.0
      %470 = vmatpush2.msra.mxu0 0.0
      %471 = vmatprep.subr.mxu0 0.0
      %472 = vmatpush2.msra.mxu0 0.0
      %473 = vmatprep.subr.mxu0 0.0
      %474 = vmatpush2.msra.mxu0 0.0
      %475 = vmatprep.subr.mxu0 0.0
      %476 = vmatpush2.msra.mxu0 0.0
      %477 = vmatprep.subr.mxu0 0.0
      %478 = vmatpush2.msra.mxu0 0.0
      %479 = vmatprep.subr.mxu0 0.0
      %480 = vmatpush2.msra.mxu0 0.0
      %481 = vmatprep.subr.mxu0 0.0
      %482 = vmatpush2.msra.mxu0 0.0
      %483 = vmatprep.subr.mxu0 0.0
      %484 = vmatpush2.msra.mxu0 0.0
      %485 = vmatprep.subr.mxu0 0.0
      %486 = vmatpush2.msra.mxu0 0.0
      %487 = vmatprep.subr.mxu0 0.0
      %488 = vmatpush2.msra.mxu0 0.0
      %489 = vmatprep.subr.mxu0 0.0
      %490 = vmatpush2.msra.mxu0 0.0
      %491 = vmatprep.subr.mxu0 0.0
      %492 = vmatpush2.msra.mxu0 0.0
      %493 = vmatprep.subr.mxu0 0.0
      %494 = vmatpush2.msra.mxu0 0.0
      %495 = vmatprep.subr.mxu0 0.0
      %496 = vmatpush2.msra.mxu0 0.0
      %497 = vmatprep.subr.mxu0 0.0
      %498 = vmatpush2.msra.mxu0 0.0
      %499 = vmatprep.subr.mxu0 0.0
      %500 = vmatpush2.msra.mxu0 0.0
      %501 = vmatprep.mubr.f32.mxu0 0.0
      %502 = vmatmul.mubr.f32.gmra.mxu0 %v426
      %v503 = vpop.f32.mrf.mxu0
      %v504 = vadd.f32 %v340, %v503
      %v505 = vpop.f32.mrf.mxu0
      %v506 = vadd.f32 %v342, %v505
      %507 = vmatprep.mubr.f32.mxu0 0.0
      %508 = vmatmul.mubr.f32.gmra.mxu0 %v429
      %v509 = vpop.f32.mrf.mxu0
      %v510 = vadd.f32 %v346, %v509
      %v511 = vpop.f32.mrf.mxu0
      %v512 = vadd.f32 %v348, %v511
      %513 = vdwg.mxu0
      %514 = vmatprep.subr.mxu0 0.0
      %515 = vmatpush1.msra.mxu0 0.0
      %516 = vmatprep.subr.mxu0 0.0
      %517 = vmatpush1.msra.mxu0 0.0
      %518 = vmatprep.subr.mxu0 0.0
      %519 = vmatpush1.msra.mxu0 0.0
      %520 = vmatprep.subr.mxu0 0.0
      %521 = vmatpush1.msra.mxu0 0.0
      %522 = vmatprep.subr.mxu0 0.0
      %523 = vmatpush1.msra.mxu0 0.0
      %524 = vmatprep.subr.mxu0 0.0
      %525 = vmatpush1.msra.mxu0 0.0
      %526 = vmatprep.subr.mxu0 0.0
      %527 = vmatpush1.msra.mxu0 0.0
      %528 = vmatprep.subr.mxu0 0.0
      %529 = vmatpush1.msra.mxu0 0.0
      %530 = vmatprep.subr.mxu0 0.0
      %531 = vmatpush1.msra.mxu0 0.0
      %532 = vmatprep.subr.mxu0 0.0
      %533 = vmatpush1.msra.mxu0 0.0
      %534 = vmatprep.subr.mxu0 0.0
      %535 = vmatpush1.msra.mxu0 0.0
      %536 = vmatprep.subr.mxu0 0.0
      %537 = vmatpush1.msra.mxu0 0.0
      %538 = vmatprep.subr.mxu0 0.0
      %539 = vmatpush1.msra.mxu0 0.0
      %540 = vmatprep.subr.mxu0 0.0
      %541 = vmatpush1.msra.mxu0 0.0
      %542 = vmatprep.subr.mxu0 0.0
      %543 = vmatpush1.msra.mxu0 %v435
      %544 = vmatprep.subr.mxu0 0.0
      %545 = vmatpush1.msra.mxu0 %v216
      %546 = vmatprep.subr.mxu0 0.0
      %547 = vmatpush2.msra.mxu0 0.0
      %548 = vmatprep.subr.mxu0 0.0
      %549 = vmatpush2.msra.mxu0 0.0
      %550 = vmatprep.subr.mxu0 0.0
      %551 = vmatpush2.msra.mxu0 0.0
      %552 = vmatprep.subr.mxu0 0.0
      %553 = vmatpush2.msra.mxu0 0.0
      %554 = vmatprep.subr.mxu0 0.0
      %555 = vmatpush2.msra.mxu0 0.0
      %556 = vmatprep.subr.mxu0 0.0
      %557 = vmatpush2.msra.mxu0 0.0
      %558 = vmatprep.subr.mxu0 0.0
      %559 = vmatpush2.msra.mxu0 0.0
      %560 = vmatprep.subr.mxu0 0.0
      %561 = vmatpush2.msra.mxu0 0.0
      %562 = vmatprep.subr.mxu0 0.0
      %563 = vmatpush2.msra.mxu0 0.0
      %564 = vmatprep.subr.mxu0 0.0
      %565 = vmatpush2.msra.mxu0 0.0
      %566 = vmatprep.subr.mxu0 0.0
      %567 = vmatpush2.msra.mxu0 0.0
      %568 = vmatprep.subr.mxu0 0.0
      %569 = vmatpush2.msra.mxu0 0.0
      %570 = vmatprep.subr.mxu0 0.0
      %571 = vmatpush2.msra.mxu0 0.0
      %572 = vmatprep.subr.mxu0 0.0
      %573 = vmatpush2.msra.mxu0 0.0
      %574 = vmatprep.subr.mxu0 0.0
      %575 = vmatpush2.msra.mxu0 0.0
      %576 = vmatprep.subr.mxu0 0.0
      %577 = vmatpush2.msra.mxu0 0.0
      %578 = vmatprep.mubr.f32.mxu0 0.0
      %579 = vmatmul.mubr.f32.gmra.mxu0 %v426
      %v580 = vpop.f32.mrf.mxu0
      %v581 = vadd.f32 %v417, %v580
      %v582 = vpop.f32.mrf.mxu0
      %583 = vmatprep.mubr.f32.mxu0 0.0
      %584 = vmatmul.mubr.f32.gmra.mxu0 %v429
      %v585 = vpop.f32.mrf.mxu0
      %v586 = vadd.f32 %v422, %v585
      %v587 = vpop.f32.mrf.mxu0
      %588 = vdwg.mxu0
      %s589 = scalar_lea.vmem %s1, 32
      %v590 = vld [vmem:[%s589] sm:$0xff]
      %v591 = vld [vmem:[%s589 + $0x8] sm:$0x3]
      %592 = vrot.lane.b32.xlu0 %v214, 126
      %v593 = vpop.permute.xlu0 %592
      %594 = vrot.lane.b32.xlu0 %v215, 126
      %v595 = vpop.permute.xlu0 %594
      %596 = vrot.lane.b32.xlu0 %v216, 126
      %v597 = vpop.permute.xlu0 %596
      %598 = vrot.lane.b32.xlu0 %v223, 126
      %v599 = vpop.permute.xlu0 %598
      %600 = vrot.lane.b32.xlu0 %v217, 126
      %v601 = vpop.permute.xlu0 %600
      %602 = vrot.lane.b32.xlu0 %v218, 126
      %v603 = vpop.permute.xlu0 %602
      %604 = vrot.lane.b32.xlu0 %v219, 126
      %v605 = vpop.permute.xlu0 %604
      %606 = vrot.lane.b32.xlu0 %v224, 126
      %v607 = vpop.permute.xlu0 %606
      %vm608 = vcmask 1031168
      %v609 = vsel %vm608, %v593, %v595
      %v610 = vsel %vm608, %v595, %v597
      %v611 = vsel %vm608, %v597, %v599
      %v612 = vsel %vm608, %v601, %v603
      %v613 = vsel %vm608, %v603, %v605
      %v614 = vsel %vm608, %v605, %v607
      %v619 = vsel %vm259, %v590, 0
      %v622 = vsel %vm259, %v591, 0
      %v624 = vsel %vm266, %v612, 0
      %v626 = vsel %vm266, %v613, 0
      %v628 = vsel %vm266, %v614, 0
      %630 = vmatprep.subr.mxu0 0.0
      %631 = vmatpush1.msra.mxu0 0.0
      %632 = vmatprep.subr.mxu0 0.0
      %633 = vmatpush1.msra.mxu0 0.0
      %634 = vmatprep.subr.mxu0 0.0
      %635 = vmatpush1.msra.mxu0 0.0
      %636 = vmatprep.subr.mxu0 0.0
      %637 = vmatpush1.msra.mxu0 0.0
      %638 = vmatprep.subr.mxu0 0.0
      %639 = vmatpush1.msra.mxu0 0.0
      %640 = vmatprep.subr.mxu0 0.0
      %641 = vmatpush1.msra.mxu0 0.0
      %642 = vmatprep.subr.mxu0 0.0
      %643 = vmatpush1.msra.mxu0 0.0
      %644 = vmatprep.subr.mxu0 0.0
      %645 = vmatpush1.msra.mxu0 0.0
      %646 = vmatprep.subr.mxu0 0.0
      %647 = vmatpush1.msra.mxu0 0.0
      %648 = vmatprep.subr.mxu0 0.0
      %649 = vmatpush1.msra.mxu0 0.0
      %650 = vmatprep.subr.mxu0 0.0
      %651 = vmatpush1.msra.mxu0 0.0
      %652 = vmatprep.subr.mxu0 0.0
      %653 = vmatpush1.msra.mxu0 0.0
      %654 = vmatprep.subr.mxu0 0.0
      %655 = vmatpush1.msra.mxu0 0.0
      %656 = vmatprep.subr.mxu0 0.0
      %657 = vmatpush1.msra.mxu0 0.0
      %658 = vmatprep.subr.mxu0 %v626
      %659 = vmatpush1.msra.mxu0 %v624
      %660 = vmatprep.subr.mxu0 %v610
      %661 = vmatpush1.msra.mxu0 %v609
      %662 = vmatprep.subr.mxu0 0.0
      %663 = vmatpush2.msra.mxu0 0.0
      %664 = vmatprep.subr.mxu0 0.0
      %665 = vmatpush2.msra.mxu0 0.0
      %666 = vmatprep.subr.mxu0 0.0
      %667 = vmatpush2.msra.mxu0 0.0
      %668 = vmatprep.subr.mxu0 0.0
      %669 = vmatpush2.msra.mxu0 0.0
      %670 = vmatprep.subr.mxu0 0.0
      %671 = vmatpush2.msra.mxu0 0.0
      %672 = vmatprep.subr.mxu0 0.0
      %673 = vmatpush2.msra.mxu0 0.0
      %674 = vmatprep.subr.mxu0 0.0
      %675 = vmatpush2.msra.mxu0 0.0
      %676 = vmatprep.subr.mxu0 0.0
      %677 = vmatpush2.msra.mxu0 0.0
      %678 = vmatprep.subr.mxu0 0.0
      %679 = vmatpush2.msra.mxu0 0.0
      %680 = vmatprep.subr.mxu0 0.0
      %681 = vmatpush2.msra.mxu0 0.0
      %682 = vmatprep.subr.mxu0 0.0
      %683 = vmatpush2.msra.mxu0 0.0
      %684 = vmatprep.subr.mxu0 0.0
      %685 = vmatpush2.msra.mxu0 0.0
      %686 = vmatprep.subr.mxu0 0.0
      %687 = vmatpush2.msra.mxu0 0.0
      %688 = vmatprep.subr.mxu0 0.0
      %689 = vmatpush2.msra.mxu0 0.0
      %690 = vmatprep.subr.mxu0 0.0
      %691 = vmatpush2.msra.mxu0 0.0
      %692 = vmatprep.subr.mxu0 0.0
      %693 = vmatpush2.msra.mxu0 0.0
      %694 = vmatprep.mubr.f32.mxu0 0.0
      %695 = vmatmul.mubr.f32.gmra.mxu0 %v619
      %v696 = vpop.f32.mrf.mxu0
      %v697 = vadd.f32 0.0, %v696
      %v698 = vpop.f32.mrf.mxu0
      %v699 = vadd.f32 0.0, %v698
      %700 = vmatprep.mubr.f32.mxu0 0.0
      %701 = vmatmul.mubr.f32.gmra.mxu0 %v622
      %v702 = vpop.f32.mrf.mxu0
      %v703 = vadd.f32 0.0, %v702
      %v704 = vpop.f32.mrf.mxu0
      %v705 = vadd.f32 0.0, %v704
      %706 = vdwg.mxu0
      %707 = vmatprep.subr.mxu0 0.0
      %708 = vmatpush1.msra.mxu0 0.0
      %709 = vmatprep.subr.mxu0 0.0
      %710 = vmatpush1.msra.mxu0 0.0
      %711 = vmatprep.subr.mxu0 0.0
      %712 = vmatpush1.msra.mxu0 0.0
      %713 = vmatprep.subr.mxu0 0.0
      %714 = vmatpush1.msra.mxu0 0.0
      %715 = vmatprep.subr.mxu0 0.0
      %716 = vmatpush1.msra.mxu0 0.0
      %717 = vmatprep.subr.mxu0 0.0
      %718 = vmatpush1.msra.mxu0 0.0
      %719 = vmatprep.subr.mxu0 0.0
      %720 = vmatpush1.msra.mxu0 0.0
      %721 = vmatprep.subr.mxu0 0.0
      %722 = vmatpush1.msra.mxu0 0.0
      %723 = vmatprep.subr.mxu0 0.0
      %724 = vmatpush1.msra.mxu0 0.0
      %725 = vmatprep.subr.mxu0 0.0
      %726 = vmatpush1.msra.mxu0 0.0
      %727 = vmatprep.subr.mxu0 0.0
      %728 = vmatpush1.msra.mxu0 0.0
      %729 = vmatprep.subr.mxu0 0.0
      %730 = vmatpush1.msra.mxu0 0.0
      %731 = vmatprep.subr.mxu0 0.0
      %732 = vmatpush1.msra.mxu0 0.0
      %733 = vmatprep.subr.mxu0 0.0
      %734 = vmatpush1.msra.mxu0 0.0
      %735 = vmatprep.subr.mxu0 0.0
      %736 = vmatpush1.msra.mxu0 %v628
      %737 = vmatprep.subr.mxu0 0.0
      %738 = vmatpush1.msra.mxu0 %v611
      %739 = vmatprep.subr.mxu0 0.0
      %740 = vmatpush2.msra.mxu0 0.0
      %741 = vmatprep.subr.mxu0 0.0
      %742 = vmatpush2.msra.mxu0 0.0
      %743 = vmatprep.subr.mxu0 0.0
      %744 = vmatpush2.msra.mxu0 0.0
      %745 = vmatprep.subr.mxu0 0.0
      %746 = vmatpush2.msra.mxu0 0.0
      %747 = vmatprep.subr.mxu0 0.0
      %748 = vmatpush2.msra.mxu0 0.0
      %749 = vmatprep.subr.mxu0 0.0
      %750 = vmatpush2.msra.mxu0 0.0
      %751 = vmatprep.subr.mxu0 0.0
      %752 = vmatpush2.msra.mxu0 0.0
      %753 = vmatprep.subr.mxu0 0.0
      %754 = vmatpush2.msra.mxu0 0.0
      %755 = vmatprep.subr.mxu0 0.0
      %756 = vmatpush2.msra.mxu0 0.0
      %757 = vmatprep.subr.mxu0 0.0
      %758 = vmatpush2.msra.mxu0 0.0
      %759 = vmatprep.subr.mxu0 0.0
      %760 = vmatpush2.msra.mxu0 0.0
      %761 = vmatprep.subr.mxu0 0.0
      %762 = vmatpush2.msra.mxu0 0.0
      %763 = vmatprep.subr.mxu0 0.0
      %764 = vmatpush2.msra.mxu0 0.0
      %765 = vmatprep.subr.mxu0 0.0
      %766 = vmatpush2.msra.mxu0 0.0
      %767 = vmatprep.subr.mxu0 0.0
      %768 = vmatpush2.msra.mxu0 0.0
      %769 = vmatprep.subr.mxu0 0.0
      %770 = vmatpush2.msra.mxu0 0.0
      %771 = vmatprep.mubr.f32.mxu0 0.0
      %772 = vmatmul.mubr.f32.gmra.mxu0 %v619
      %v773 = vpop.f32.mrf.mxu0
      %v774 = vadd.f32 0.0, %v773
      %v775 = vpop.f32.mrf.mxu0
      %776 = vmatprep.mubr.f32.mxu0 0.0
      %777 = vmatmul.mubr.f32.gmra.mxu0 %v622
      %v778 = vpop.f32.mrf.mxu0
      %v779 = vadd.f32 0.0, %v778
      %v780 = vpop.f32.mrf.mxu0
      %781 = vdwg.mxu0
      %v782 = vadd.f32 %v504, %v697
      %v783 = vadd.f32 %v506, %v699
      %v784 = vadd.f32 %v581, %v774
      %v785 = vadd.f32 %v510, %v703
      %v786 = vadd.f32 %v512, %v705
      %v787 = vadd.f32 %v586, %v779
      %s788 = scalar_lea.vmem %s1, 48
      %v789 = vld [vmem:[%s788] sm:$0xff]
      %v790 = vld [vmem:[%s788 + $0x8] sm:$0x3]
      %791 = vrot.lane.b32.xlu0 %v214, 108
      %v792 = vpop.permute.xlu0 %791
      %793 = vrot.lane.b32.xlu0 %v215, 108
      %v794 = vpop.permute.xlu0 %793
      %795 = vrot.lane.b32.xlu0 %v216, 108
      %v796 = vpop.permute.xlu0 %795
      %797 = vrot.lane.b32.xlu0 %v223, 108
      %v798 = vpop.permute.xlu0 %797
      %799 = vrot.lane.b32.xlu0 %v217, 108
      %v800 = vpop.permute.xlu0 %799
      %801 = vrot.lane.b32.xlu0 %v218, 108
      %v802 = vpop.permute.xlu0 %801
      %803 = vrot.lane.b32.xlu0 %v219, 108
      %v804 = vpop.permute.xlu0 %803
      %805 = vrot.lane.b32.xlu0 %v224, 108
      %v806 = vpop.permute.xlu0 %805
      %vm807 = vcmask 883712
      %v808 = vsel %vm807, %v792, %v794
      %v809 = vsel %vm807, %v794, %v796
      %v810 = vsel %vm807, %v796, %v798
      %v811 = vsel %vm807, %v800, %v802
      %v812 = vsel %vm807, %v802, %v804
      %v813 = vsel %vm807, %v804, %v806
      %v818 = vsel %vm259, %v789, 0
      %v821 = vsel %vm259, %v790, 0
      %v823 = vsel %vm266, %v811, 0
      %v825 = vsel %vm266, %v812, 0
      %v827 = vsel %vm266, %v813, 0
      %829 = vmatprep.subr.mxu0 0.0
      %830 = vmatpush1.msra.mxu0 0.0
      %831 = vmatprep.subr.mxu0 0.0
      %832 = vmatpush1.msra.mxu0 0.0
      %833 = vmatprep.subr.mxu0 0.0
      %834 = vmatpush1.msra.mxu0 0.0
      %835 = vmatprep.subr.mxu0 0.0
      %836 = vmatpush1.msra.mxu0 0.0
      %837 = vmatprep.subr.mxu0 0.0
      %838 = vmatpush1.msra.mxu0 0.0
      %839 = vmatprep.subr.mxu0 0.0
      %840 = vmatpush1.msra.mxu0 0.0
      %841 = vmatprep.subr.mxu0 0.0
      %842 = vmatpush1.msra.mxu0 0.0
      %843 = vmatprep.subr.mxu0 0.0
      %844 = vmatpush1.msra.mxu0 0.0
      %845 = vmatprep.subr.mxu0 0.0
      %846 = vmatpush1.msra.mxu0 0.0
      %847 = vmatprep.subr.mxu0 0.0
      %848 = vmatpush1.msra.mxu0 0.0
      %849 = vmatprep.subr.mxu0 0.0
      %850 = vmatpush1.msra.mxu0 0.0
      %851 = vmatprep.subr.mxu0 0.0
      %852 = vmatpush1.msra.mxu0 0.0
      %853 = vmatprep.subr.mxu0 0.0
      %854 = vmatpush1.msra.mxu0 0.0
      %855 = vmatprep.subr.mxu0 0.0
      %856 = vmatpush1.msra.mxu0 0.0
      %857 = vmatprep.subr.mxu0 %v825
      %858 = vmatpush1.msra.mxu0 %v823
      %859 = vmatprep.subr.mxu0 %v809
      %860 = vmatpush1.msra.mxu0 %v808
      %861 = vmatprep.subr.mxu0 0.0
      %862 = vmatpush2.msra.mxu0 0.0
      %863 = vmatprep.subr.mxu0 0.0
      %864 = vmatpush2.msra.mxu0 0.0
      %865 = vmatprep.subr.mxu0 0.0
      %866 = vmatpush2.msra.mxu0 0.0
      %867 = vmatprep.subr.mxu0 0.0
      %868 = vmatpush2.msra.mxu0 0.0
      %869 = vmatprep.subr.mxu0 0.0
      %870 = vmatpush2.msra.mxu0 0.0
      %871 = vmatprep.subr.mxu0 0.0
      %872 = vmatpush2.msra.mxu0 0.0
      %873 = vmatprep.subr.mxu0 0.0
      %874 = vmatpush2.msra.mxu0 0.0
      %875 = vmatprep.subr.mxu0 0.0
      %876 = vmatpush2.msra.mxu0 0.0
      %877 = vmatprep.subr.mxu0 0.0
      %878 = vmatpush2.msra.mxu0 0.0
      %879 = vmatprep.subr.mxu0 0.0
      %880 = vmatpush2.msra.mxu0 0.0
      %881 = vmatprep.subr.mxu0 0.0
      %882 = vmatpush2.msra.mxu0 0.0
      %883 = vmatprep.subr.mxu0 0.0
      %884 = vmatpush2.msra.mxu0 0.0
      %885 = vmatprep.subr.mxu0 0.0
      %886 = vmatpush2.msra.mxu0 0.0
      %887 = vmatprep.subr.mxu0 0.0
      %888 = vmatpush2.msra.mxu0 0.0
      %889 = vmatprep.subr.mxu0 0.0
      %890 = vmatpush2.msra.mxu0 0.0
      %891 = vmatprep.subr.mxu0 0.0
      %892 = vmatpush2.msra.mxu0 0.0
      %893 = vmatprep.mubr.f32.mxu0 0.0
      %894 = vmatmul.mubr.f32.gmra.mxu0 %v818
      %v895 = vpop.f32.mrf.mxu0
      %v896 = vadd.f32 0.0, %v895
      %v897 = vpop.f32.mrf.mxu0
      %v898 = vadd.f32 0.0, %v897
      %899 = vmatprep.mubr.f32.mxu0 0.0
      %900 = vmatmul.mubr.f32.gmra.mxu0 %v821
      %v901 = vpop.f32.mrf.mxu0
      %v902 = vadd.f32 0.0, %v901
      %v903 = vpop.f32.mrf.mxu0
      %v904 = vadd.f32 0.0, %v903
      %905 = vdwg.mxu0
      %906 = vmatprep.subr.mxu0 0.0
      %907 = vmatpush1.msra.mxu0 0.0
      %908 = vmatprep.subr.mxu0 0.0
      %909 = vmatpush1.msra.mxu0 0.0
      %910 = vmatprep.subr.mxu0 0.0
      %911 = vmatpush1.msra.mxu0 0.0
      %912 = vmatprep.subr.mxu0 0.0
      %913 = vmatpush1.msra.mxu0 0.0
      %914 = vmatprep.subr.mxu0 0.0
      %915 = vmatpush1.msra.mxu0 0.0
      %916 = vmatprep.subr.mxu0 0.0
      %917 = vmatpush1.msra.mxu0 0.0
      %918 = vmatprep.subr.mxu0 0.0
      %919 = vmatpush1.msra.mxu0 0.0
      %920 = vmatprep.subr.mxu0 0.0
      %921 = vmatpush1.msra.mxu0 0.0
      %922 = vmatprep.subr.mxu0 0.0
      %923 = vmatpush1.msra.mxu0 0.0
      %924 = vmatprep.subr.mxu0 0.0
      %925 = vmatpush1.msra.mxu0 0.0
      %926 = vmatprep.subr.mxu0 0.0
      %927 = vmatpush1.msra.mxu0 0.0
      %928 = vmatprep.subr.mxu0 0.0
      %929 = vmatpush1.msra.mxu0 0.0
      %930 = vmatprep.subr.mxu0 0.0
      %931 = vmatpush1.msra.mxu0 0.0
      %932 = vmatprep.subr.mxu0 0.0
      %933 = vmatpush1.msra.mxu0 0.0
      %934 = vmatprep.subr.mxu0 0.0
      %935 = vmatpush1.msra.mxu0 %v827
      %936 = vmatprep.subr.mxu0 0.0
      %937 = vmatpush1.msra.mxu0 %v810
      %938 = vmatprep.subr.mxu0 0.0
      %939 = vmatpush2.msra.mxu0 0.0
      %940 = vmatprep.subr.mxu0 0.0
      %941 = vmatpush2.msra.mxu0 0.0
      %942 = vmatprep.subr.mxu0 0.0
      %943 = vmatpush2.msra.mxu0 0.0
      %944 = vmatprep.subr.mxu0 0.0
      %945 = vmatpush2.msra.mxu0 0.0
      %946 = vmatprep.subr.mxu0 0.0
      %947 = vmatpush2.msra.mxu0 0.0
      %948 = vmatprep.subr.mxu0 0.0
      %949 = vmatpush2.msra.mxu0 0.0
      %950 = vmatprep.subr.mxu0 0.0
      %951 = vmatpush2.msra.mxu0 0.0
      %952 = vmatprep.subr.mxu0 0.0
      %953 = vmatpush2.msra.mxu0 0.0
      %954 = vmatprep.subr.mxu0 0.0
      %955 = vmatpush2.msra.mxu0 0.0
      %956 = vmatprep.subr.mxu0 0.0
      %957 = vmatpush2.msra.mxu0 0.0
      %958 = vmatprep.subr.mxu0 0.0
      %959 = vmatpush2.msra.mxu0 0.0
      %960 = vmatprep.subr.mxu0 0.0
      %961 = vmatpush2.msra.mxu0 0.0
      %962 = vmatprep.subr.mxu0 0.0
      %963 = vmatpush2.msra.mxu0 0.0
      %964 = vmatprep.subr.mxu0 0.0
      %965 = vmatpush2.msra.mxu0 0.0
      %966 = vmatprep.subr.mxu0 0.0
      %967 = vmatpush2.msra.mxu0 0.0
      %968 = vmatprep.subr.mxu0 0.0
      %969 = vmatpush2.msra.mxu0 0.0
      %970 = vmatprep.mubr.f32.mxu0 0.0
      %971 = vmatmul.mubr.f32.gmra.mxu0 %v818
      %v972 = vpop.f32.mrf.mxu0
      %v973 = vadd.f32 0.0, %v972
      %v974 = vpop.f32.mrf.mxu0
      %975 = vmatprep.mubr.f32.mxu0 0.0
      %976 = vmatmul.mubr.f32.gmra.mxu0 %v821
      %v977 = vpop.f32.mrf.mxu0
      %v978 = vadd.f32 0.0, %v977
      %v979 = vpop.f32.mrf.mxu0
      %980 = vdwg.mxu0
      %v981 = vadd.f32 %v782, %v896
      %v982 = vadd.f32 %v783, %v898
      %v983 = vadd.f32 %v784, %v973
      %v984 = vadd.f32 %v785, %v902
      %v985 = vadd.f32 %v786, %v904
      %v986 = vadd.f32 %v787, %v978
      %s987 = scalar_lea.vmem %s1, 64
      %v988 = vld [vmem:[%s987] sm:$0xff]
      %v989 = vld [vmem:[%s987 + $0x8] sm:$0x3]
      %990 = vrot.lane.b32.xlu0 %v214, 107
      %v991 = vpop.permute.xlu0 %990
      %992 = vrot.lane.b32.xlu0 %v215, 107
      %v993 = vpop.permute.xlu0 %992
      %994 = vrot.lane.b32.xlu0 %v216, 107
      %v995 = vpop.permute.xlu0 %994
      %996 = vrot.lane.b32.xlu0 %v223, 107
      %v997 = vpop.permute.xlu0 %996
      %998 = vrot.lane.b32.xlu0 %v217, 107
      %v999 = vpop.permute.xlu0 %998
      %1000 = vrot.lane.b32.xlu0 %v218, 107
      %v1001 = vpop.permute.xlu0 %1000
      %1002 = vrot.lane.b32.xlu0 %v219, 107
      %v1003 = vpop.permute.xlu0 %1002
      %1004 = vrot.lane.b32.xlu0 %v224, 107
      %v1005 = vpop.permute.xlu0 %1004
      %vm1006 = vcmask 875520
      %v1007 = vsel %vm1006, %v991, %v993
      %v1008 = vsel %vm1006, %v993, %v995
      %v1009 = vsel %vm1006, %v995, %v997
      %v1010 = vsel %vm1006, %v999, %v1001
      %v1011 = vsel %vm1006, %v1001, %v1003
      %v1012 = vsel %vm1006, %v1003, %v1005
      %v1017 = vsel %vm259, %v988, 0
      %v1020 = vsel %vm259, %v989, 0
      %v1022 = vsel %vm266, %v1010, 0
      %v1024 = vsel %vm266, %v1011, 0
      %v1026 = vsel %vm266, %v1012, 0
      %1028 = vmatprep.subr.mxu0 0.0
      %1029 = vmatpush1.msra.mxu0 0.0
      %1030 = vmatprep.subr.mxu0 0.0
      %1031 = vmatpush1.msra.mxu0 0.0
      %1032 = vmatprep.subr.mxu0 0.0
      %1033 = vmatpush1.msra.mxu0 0.0
      %1034 = vmatprep.subr.mxu0 0.0
      %1035 = vmatpush1.msra.mxu0 0.0
      %1036 = vmatprep.subr.mxu0 0.0
      %1037 = vmatpush1.msra.mxu0 0.0
      %1038 = vmatprep.subr.mxu0 0.0
      %1039 = vmatpush1.msra.mxu0 0.0
      %1040 = vmatprep.subr.mxu0 0.0
      %1041 = vmatpush1.msra.mxu0 0.0
      %1042 = vmatprep.subr.mxu0 0.0
      %1043 = vmatpush1.msra.mxu0 0.0
      %1044 = vmatprep.subr.mxu0 0.0
      %1045 = vmatpush1.msra.mxu0 0.0
      %1046 = vmatprep.subr.mxu0 0.0
      %1047 = vmatpush1.msra.mxu0 0.0
      %1048 = vmatprep.subr.mxu0 0.0
      %1049 = vmatpush1.msra.mxu0 0.0
      %1050 = vmatprep.subr.mxu0 0.0
      %1051 = vmatpush1.msra.mxu0 0.0
      %1052 = vmatprep.subr.mxu0 0.0
      %1053 = vmatpush1.msra.mxu0 0.0
      %1054 = vmatprep.subr.mxu0 0.0
      %1055 = vmatpush1.msra.mxu0 0.0
      %1056 = vmatprep.subr.mxu0 %v1024
      %1057 = vmatpush1.msra.mxu0 %v1022
      %1058 = vmatprep.subr.mxu0 %v1008
      %1059 = vmatpush1.msra.mxu0 %v1007
      %1060 = vmatprep.subr.mxu0 0.0
      %1061 = vmatpush2.msra.mxu0 0.0
      %1062 = vmatprep.subr.mxu0 0.0
      %1063 = vmatpush2.msra.mxu0 0.0
      %1064 = vmatprep.subr.mxu0 0.0
      %1065 = vmatpush2.msra.mxu0 0.0
      %1066 = vmatprep.subr.mxu0 0.0
      %1067 = vmatpush2.msra.mxu0 0.0
      %1068 = vmatprep.subr.mxu0 0.0
      %1069 = vmatpush2.msra.mxu0 0.0
      %1070 = vmatprep.subr.mxu0 0.0
      %1071 = vmatpush2.msra.mxu0 0.0
      %1072 = vmatprep.subr.mxu0 0.0
      %1073 = vmatpush2.msra.mxu0 0.0
      %1074 = vmatprep.subr.mxu0 0.0
      %1075 = vmatpush2.msra.mxu0 0.0
      %1076 = vmatprep.subr.mxu0 0.0
      %1077 = vmatpush2.msra.mxu0 0.0
      %1078 = vmatprep.subr.mxu0 0.0
      %1079 = vmatpush2.msra.mxu0 0.0
      %1080 = vmatprep.subr.mxu0 0.0
      %1081 = vmatpush2.msra.mxu0 0.0
      %1082 = vmatprep.subr.mxu0 0.0
      %1083 = vmatpush2.msra.mxu0 0.0
      %1084 = vmatprep.subr.mxu0 0.0
      %1085 = vmatpush2.msra.mxu0 0.0
      %1086 = vmatprep.subr.mxu0 0.0
      %1087 = vmatpush2.msra.mxu0 0.0
      %1088 = vmatprep.subr.mxu0 0.0
      %1089 = vmatpush2.msra.mxu0 0.0
      %1090 = vmatprep.subr.mxu0 0.0
      %1091 = vmatpush2.msra.mxu0 0.0
      %1092 = vmatprep.mubr.f32.mxu0 0.0
      %1093 = vmatmul.mubr.f32.gmra.mxu0 %v1017
      %v1094 = vpop.f32.mrf.mxu0
      %v1095 = vadd.f32 0.0, %v1094
      %v1096 = vpop.f32.mrf.mxu0
      %v1097 = vadd.f32 0.0, %v1096
      %1098 = vmatprep.mubr.f32.mxu0 0.0
      %1099 = vmatmul.mubr.f32.gmra.mxu0 %v1020
      %v1100 = vpop.f32.mrf.mxu0
      %v1101 = vadd.f32 0.0, %v1100
      %v1102 = vpop.f32.mrf.mxu0
      %v1103 = vadd.f32 0.0, %v1102
      %1104 = vdwg.mxu0
      %1105 = vmatprep.subr.mxu0 0.0
      %1106 = vmatpush1.msra.mxu0 0.0
      %1107 = vmatprep.subr.mxu0 0.0
      %1108 = vmatpush1.msra.mxu0 0.0
      %1109 = vmatprep.subr.mxu0 0.0
      %1110 = vmatpush1.msra.mxu0 0.0
      %1111 = vmatprep.subr.mxu0 0.0
      %1112 = vmatpush1.msra.mxu0 0.0
      %1113 = vmatprep.subr.mxu0 0.0
      %1114 = vmatpush1.msra.mxu0 0.0
      %1115 = vmatprep.subr.mxu0 0.0
      %1116 = vmatpush1.msra.mxu0 0.0
      %1117 = vmatprep.subr.mxu0 0.0
      %1118 = vmatpush1.msra.mxu0 0.0
      %1119 = vmatprep.subr.mxu0 0.0
      %1120 = vmatpush1.msra.mxu0 0.0
      %1121 = vmatprep.subr.mxu0 0.0
      %1122 = vmatpush1.msra.mxu0 0.0
      %1123 = vmatprep.subr.mxu0 0.0
      %1124 = vmatpush1.msra.mxu0 0.0
      %1125 = vmatprep.subr.mxu0 0.0
      %1126 = vmatpush1.msra.mxu0 0.0
      %1127 = vmatprep.subr.mxu0 0.0
      %1128 = vmatpush1.msra.mxu0 0.0
      %1129 = vmatprep.subr.mxu0 0.0
      %1130 = vmatpush1.msra.mxu0 0.0
      %1131 = vmatprep.subr.mxu0 0.0
      %1132 = vmatpush1.msra.mxu0 0.0
      %1133 = vmatprep.subr.mxu0 0.0
      %1134 = vmatpush1.msra.mxu0 %v1026
      %1135 = vmatprep.subr.mxu0 0.0
      %1136 = vmatpush1.msra.mxu0 %v1009
      %1137 = vmatprep.subr.mxu0 0.0
      %1138 = vmatpush2.msra.mxu0 0.0
      %1139 = vmatprep.subr.mxu0 0.0
      %1140 = vmatpush2.msra.mxu0 0.0
      %1141 = vmatprep.subr.mxu0 0.0
      %1142 = vmatpush2.msra.mxu0 0.0
      %1143 = vmatprep.subr.mxu0 0.0
      %1144 = vmatpush2.msra.mxu0 0.0
      %1145 = vmatprep.subr.mxu0 0.0
      %1146 = vmatpush2.msra.mxu0 0.0
      %1147 = vmatprep.subr.mxu0 0.0
      %1148 = vmatpush2.msra.mxu0 0.0
      %1149 = vmatprep.subr.mxu0 0.0
      %1150 = vmatpush2.msra.mxu0 0.0
      %1151 = vmatprep.subr.mxu0 0.0
      %1152 = vmatpush2.msra.mxu0 0.0
      %1153 = vmatprep.subr.mxu0 0.0
      %1154 = vmatpush2.msra.mxu0 0.0
      %1155 = vmatprep.subr.mxu0 0.0
      %1156 = vmatpush2.msra.mxu0 0.0
      %1157 = vmatprep.subr.mxu0 0.0
      %1158 = vmatpush2.msra.mxu0 0.0
      %1159 = vmatprep.subr.mxu0 0.0
      %1160 = vmatpush2.msra.mxu0 0.0
      %1161 = vmatprep.subr.mxu0 0.0
      %1162 = vmatpush2.msra.mxu0 0.0
      %1163 = vmatprep.subr.mxu0 0.0
      %1164 = vmatpush2.msra.mxu0 0.0
      %1165 = vmatprep.subr.mxu0 0.0
      %1166 = vmatpush2.msra.mxu0 0.0
      %1167 = vmatprep.subr.mxu0 0.0
      %1168 = vmatpush2.msra.mxu0 0.0
      %1169 = vmatprep.mubr.f32.mxu0 0.0
      %1170 = vmatmul.mubr.f32.gmra.mxu0 %v1017
      %v1171 = vpop.f32.mrf.mxu0
      %v1172 = vadd.f32 0.0, %v1171
      %v1173 = vpop.f32.mrf.mxu0
      %1174 = vmatprep.mubr.f32.mxu0 0.0
      %1175 = vmatmul.mubr.f32.gmra.mxu0 %v1020
      %v1176 = vpop.f32.mrf.mxu0
      %v1177 = vadd.f32 0.0, %v1176
      %v1178 = vpop.f32.mrf.mxu0
      %1179 = vdwg.mxu0
      %v1180 = vadd.f32 %v981, %v1095
      %v1181 = vadd.f32 %v982, %v1097
      %v1182 = vadd.f32 %v983, %v1172
      %v1183 = vadd.f32 %v984, %v1101
      %v1184 = vadd.f32 %v985, %v1103
      %v1185 = vadd.f32 %v986, %v1177
      %s1186 = scalar_lea.vmem %s1, 80
      %v1187 = vld [vmem:[%s1186] sm:$0xff]
      %v1188 = vld [vmem:[%s1186 + $0x8] sm:$0x3]
      %1189 = vrot.lane.b32.xlu0 %v214, 106
      %v1190 = vpop.permute.xlu0 %1189
      %1191 = vrot.lane.b32.xlu0 %v215, 106
      %v1192 = vpop.permute.xlu0 %1191
      %1193 = vrot.lane.b32.xlu0 %v216, 106
      %v1194 = vpop.permute.xlu0 %1193
      %1195 = vrot.lane.b32.xlu0 %v223, 106
      %v1196 = vpop.permute.xlu0 %1195
      %1197 = vrot.lane.b32.xlu0 %v217, 106
      %v1198 = vpop.permute.xlu0 %1197
      %1199 = vrot.lane.b32.xlu0 %v218, 106
      %v1200 = vpop.permute.xlu0 %1199
      %1201 = vrot.lane.b32.xlu0 %v219, 106
      %v1202 = vpop.permute.xlu0 %1201
      %1203 = vrot.lane.b32.xlu0 %v224, 106
      %v1204 = vpop.permute.xlu0 %1203
      %vm1205 = vcmask 867328
      %v1206 = vsel %vm1205, %v1190, %v1192
      %v1207 = vsel %vm1205, %v1192, %v1194
      %v1208 = vsel %vm1205, %v1194, %v1196
      %v1209 = vsel %vm1205, %v1198, %v1200
      %v1210 = vsel %vm1205, %v1200, %v1202
      %v1211 = vsel %vm1205, %v1202, %v1204
      %v1216 = vsel %vm259, %v1187, 0
      %v1219 = vsel %vm259, %v1188, 0
      %v1221 = vsel %vm266, %v1209, 0
      %v1223 = vsel %vm266, %v1210, 0
      %v1225 = vsel %vm266, %v1211, 0
      %1227 = vmatprep.subr.mxu0 0.0
      %1228 = vmatpush1.msra.mxu0 0.0
      %1229 = vmatprep.subr.mxu0 0.0
      %1230 = vmatpush1.msra.mxu0 0.0
      %1231 = vmatprep.subr.mxu0 0.0
      %1232 = vmatpush1.msra.mxu0 0.0
      %1233 = vmatprep.subr.mxu0 0.0
      %1234 = vmatpush1.msra.mxu0 0.0
      %1235 = vmatprep.subr.mxu0 0.0
      %1236 = vmatpush1.msra.mxu0 0.0
      %1237 = vmatprep.subr.mxu0 0.0
      %1238 = vmatpush1.msra.mxu0 0.0
      %1239 = vmatprep.subr.mxu0 0.0
      %1240 = vmatpush1.msra.mxu0 0.0
      %1241 = vmatprep.subr.mxu0 0.0
      %1242 = vmatpush1.msra.mxu0 0.0
      %1243 = vmatprep.subr.mxu0 0.0
      %1244 = vmatpush1.msra.mxu0 0.0
      %1245 = vmatprep.subr.mxu0 0.0
      %1246 = vmatpush1.msra.mxu0 0.0
      %1247 = vmatprep.subr.mxu0 0.0
      %1248 = vmatpush1.msra.mxu0 0.0
      %1249 = vmatprep.subr.mxu0 0.0
      %1250 = vmatpush1.msra.mxu0 0.0
      %1251 = vmatprep.subr.mxu0 0.0
      %1252 = vmatpush1.msra.mxu0 0.0
      %1253 = vmatprep.subr.mxu0 0.0
      %1254 = vmatpush1.msra.mxu0 0.0
      %1255 = vmatprep.subr.mxu0 %v1223
      %1256 = vmatpush1.msra.mxu0 %v1221
      %1257 = vmatprep.subr.mxu0 %v1207
      %1258 = vmatpush1.msra.mxu0 %v1206
      %1259 = vmatprep.subr.mxu0 0.0
      %1260 = vmatpush2.msra.mxu0 0.0
      %1261 = vmatprep.subr.mxu0 0.0
      %1262 = vmatpush2.msra.mxu0 0.0
      %1263 = vmatprep.subr.mxu0 0.0
      %1264 = vmatpush2.msra.mxu0 0.0
      %1265 = vmatprep.subr.mxu0 0.0
      %1266 = vmatpush2.msra.mxu0 0.0
      %1267 = vmatprep.subr.mxu0 0.0
      %1268 = vmatpush2.msra.mxu0 0.0
      %1269 = vmatprep.subr.mxu0 0.0
      %1270 = vmatpush2.msra.mxu0 0.0
      %1271 = vmatprep.subr.mxu0 0.0
      %1272 = vmatpush2.msra.mxu0 0.0
      %1273 = vmatprep.subr.mxu0 0.0
      %1274 = vmatpush2.msra.mxu0 0.0
      %1275 = vmatprep.subr.mxu0 0.0
      %1276 = vmatpush2.msra.mxu0 0.0
      %1277 = vmatprep.subr.mxu0 0.0
      %1278 = vmatpush2.msra.mxu0 0.0
      %1279 = vmatprep.subr.mxu0 0.0
      %1280 = vmatpush2.msra.mxu0 0.0
      %1281 = vmatprep.subr.mxu0 0.0
      %1282 = vmatpush2.msra.mxu0 0.0
      %1283 = vmatprep.subr.mxu0 0.0
      %1284 = vmatpush2.msra.mxu0 0.0
      %1285 = vmatprep.subr.mxu0 0.0
      %1286 = vmatpush2.msra.mxu0 0.0
      %1287 = vmatprep.subr.mxu0 0.0
      %1288 = vmatpush2.msra.mxu0 0.0
      %1289 = vmatprep.subr.mxu0 0.0
      %1290 = vmatpush2.msra.mxu0 0.0
      %1291 = vmatprep.mubr.f32.mxu0 0.0
      %1292 = vmatmul.mubr.f32.gmra.mxu0 %v1216
      %v1293 = vpop.f32.mrf.mxu0
      %v1294 = vadd.f32 0.0, %v1293
      %v1295 = vpop.f32.mrf.mxu0
      %v1296 = vadd.f32 0.0, %v1295
      %1297 = vmatprep.mubr.f32.mxu0 0.0
      %1298 = vmatmul.mubr.f32.gmra.mxu0 %v1219
      %v1299 = vpop.f32.mrf.mxu0
      %v1300 = vadd.f32 0.0, %v1299
      %v1301 = vpop.f32.mrf.mxu0
      %v1302 = vadd.f32 0.0, %v1301
      %1303 = vdwg.mxu0
      %1304 = vmatprep.subr.mxu0 0.0
      %1305 = vmatpush1.msra.mxu0 0.0
      %1306 = vmatprep.subr.mxu0 0.0
      %1307 = vmatpush1.msra.mxu0 0.0
      %1308 = vmatprep.subr.mxu0 0.0
      %1309 = vmatpush1.msra.mxu0 0.0
      %1310 = vmatprep.subr.mxu0 0.0
      %1311 = vmatpush1.msra.mxu0 0.0
      %1312 = vmatprep.subr.mxu0 0.0
      %1313 = vmatpush1.msra.mxu0 0.0
      %1314 = vmatprep.subr.mxu0 0.0
      %1315 = vmatpush1.msra.mxu0 0.0
      %1316 = vmatprep.subr.mxu0 0.0
      %1317 = vmatpush1.msra.mxu0 0.0
      %1318 = vmatprep.subr.mxu0 0.0
      %1319 = vmatpush1.msra.mxu0 0.0
      %1320 = vmatprep.subr.mxu0 0.0
      %1321 = vmatpush1.msra.mxu0 0.0
      %1322 = vmatprep.subr.mxu0 0.0
      %1323 = vmatpush1.msra.mxu0 0.0
      %1324 = vmatprep.subr.mxu0 0.0
      %1325 = vmatpush1.msra.mxu0 0.0
      %1326 = vmatprep.subr.mxu0 0.0
      %1327 = vmatpush1.msra.mxu0 0.0
      %1328 = vmatprep.subr.mxu0 0.0
      %1329 = vmatpush1.msra.mxu0 0.0
      %1330 = vmatprep.subr.mxu0 0.0
      %1331 = vmatpush1.msra.mxu0 0.0
      %1332 = vmatprep.subr.mxu0 0.0
      %1333 = vmatpush1.msra.mxu0 %v1225
      %1334 = vmatprep.subr.mxu0 0.0
      %1335 = vmatpush1.msra.mxu0 %v1208
      %1336 = vmatprep.subr.mxu0 0.0
      %1337 = vmatpush2.msra.mxu0 0.0
      %1338 = vmatprep.subr.mxu0 0.0
      %1339 = vmatpush2.msra.mxu0 0.0
      %1340 = vmatprep.subr.mxu0 0.0
      %1341 = vmatpush2.msra.mxu0 0.0
      %1342 = vmatprep.subr.mxu0 0.0
      %1343 = vmatpush2.msra.mxu0 0.0
      %1344 = vmatprep.subr.mxu0 0.0
      %1345 = vmatpush2.msra.mxu0 0.0
      %1346 = vmatprep.subr.mxu0 0.0
      %1347 = vmatpush2.msra.mxu0 0.0
      %1348 = vmatprep.subr.mxu0 0.0
      %1349 = vmatpush2.msra.mxu0 0.0
      %1350 = vmatprep.subr.mxu0 0.0
      %1351 = vmatpush2.msra.mxu0 0.0
      %1352 = vmatprep.subr.mxu0 0.0
      %1353 = vmatpush2.msra.mxu0 0.0
      %1354 = vmatprep.subr.mxu0 0.0
      %1355 = vmatpush2.msra.mxu0 0.0
      %1356 = vmatprep.subr.mxu0 0.0
      %1357 = vmatpush2.msra.mxu0 0.0
      %1358 = vmatprep.subr.mxu0 0.0
      %1359 = vmatpush2.msra.mxu0 0.0
      %1360 = vmatprep.subr.mxu0 0.0
      %1361 = vmatpush2.msra.mxu0 0.0
      %1362 = vmatprep.subr.mxu0 0.0
      %1363 = vmatpush2.msra.mxu0 0.0
      %1364 = vmatprep.subr.mxu0 0.0
      %1365 = vmatpush2.msra.mxu0 0.0
      %1366 = vmatprep.subr.mxu0 0.0
      %1367 = vmatpush2.msra.mxu0 0.0
      %1368 = vmatprep.mubr.f32.mxu0 0.0
      %1369 = vmatmul.mubr.f32.gmra.mxu0 %v1216
      %v1370 = vpop.f32.mrf.mxu0
      %v1371 = vadd.f32 0.0, %v1370
      %v1372 = vpop.f32.mrf.mxu0
      %1373 = vmatprep.mubr.f32.mxu0 0.0
      %1374 = vmatmul.mubr.f32.gmra.mxu0 %v1219
      %v1375 = vpop.f32.mrf.mxu0
      %v1376 = vadd.f32 0.0, %v1375
      %v1377 = vpop.f32.mrf.mxu0
      %1378 = vdwg.mxu0
      %v1379 = vadd.f32 %v1180, %v1294
      %v1380 = vadd.f32 %v1181, %v1296
      %v1381 = vadd.f32 %v1182, %v1371
      %v1382 = vadd.f32 %v1183, %v1300
      %v1383 = vadd.f32 %v1184, %v1302
      %v1384 = vadd.f32 %v1185, %v1376
      %s1385 = scalar_lea.vmem %s1, 96
      %v1386 = vld [vmem:[%s1385] sm:$0xff]
      %v1387 = vld [vmem:[%s1385 + $0x8] sm:$0x3]
      %1388 = vrot.lane.b32.xlu0 %v214, 88
      %v1389 = vpop.permute.xlu0 %1388
      %1390 = vrot.lane.b32.xlu0 %v215, 88
      %v1391 = vpop.permute.xlu0 %1390
      %1392 = vrot.lane.b32.xlu0 %v216, 88
      %v1393 = vpop.permute.xlu0 %1392
      %1394 = vrot.lane.b32.xlu0 %v223, 88
      %v1395 = vpop.permute.xlu0 %1394
      %1396 = vrot.lane.b32.xlu0 %v217, 88
      %v1397 = vpop.permute.xlu0 %1396
      %1398 = vrot.lane.b32.xlu0 %v218, 88
      %v1399 = vpop.permute.xlu0 %1398
      %1400 = vrot.lane.b32.xlu0 %v219, 88
      %v1401 = vpop.permute.xlu0 %1400
      %1402 = vrot.lane.b32.xlu0 %v224, 88
      %v1403 = vpop.permute.xlu0 %1402
      %vm1404 = vcmask 719872
      %v1405 = vsel %vm1404, %v1389, %v1391
      %v1406 = vsel %vm1404, %v1391, %v1393
      %v1407 = vsel %vm1404, %v1393, %v1395
      %v1408 = vsel %vm1404, %v1397, %v1399
      %v1409 = vsel %vm1404, %v1399, %v1401
      %v1410 = vsel %vm1404, %v1401, %v1403
      %v1415 = vsel %vm259, %v1386, 0
      %v1418 = vsel %vm259, %v1387, 0
      %v1420 = vsel %vm266, %v1408, 0
      %v1422 = vsel %vm266, %v1409, 0
      %v1424 = vsel %vm266, %v1410, 0
      %1426 = vmatprep.subr.mxu0 0.0
      %1427 = vmatpush1.msra.mxu0 0.0
      %1428 = vmatprep.subr.mxu0 0.0
      %1429 = vmatpush1.msra.mxu0 0.0
      %1430 = vmatprep.subr.mxu0 0.0
      %1431 = vmatpush1.msra.mxu0 0.0
      %1432 = vmatprep.subr.mxu0 0.0
      %1433 = vmatpush1.msra.mxu0 0.0
      %1434 = vmatprep.subr.mxu0 0.0
      %1435 = vmatpush1.msra.mxu0 0.0
      %1436 = vmatprep.subr.mxu0 0.0
      %1437 = vmatpush1.msra.mxu0 0.0
      %1438 = vmatprep.subr.mxu0 0.0
      %1439 = vmatpush1.msra.mxu0 0.0
      %1440 = vmatprep.subr.mxu0 0.0
      %1441 = vmatpush1.msra.mxu0 0.0
      %1442 = vmatprep.subr.mxu0 0.0
      %1443 = vmatpush1.msra.mxu0 0.0
      %1444 = vmatprep.subr.mxu0 0.0
      %1445 = vmatpush1.msra.mxu0 0.0
      %1446 = vmatprep.subr.mxu0 0.0
      %1447 = vmatpush1.msra.mxu0 0.0
      %1448 = vmatprep.subr.mxu0 0.0
      %1449 = vmatpush1.msra.mxu0 0.0
      %1450 = vmatprep.subr.mxu0 0.0
      %1451 = vmatpush1.msra.mxu0 0.0
      %1452 = vmatprep.subr.mxu0 0.0
      %1453 = vmatpush1.msra.mxu0 0.0
      %1454 = vmatprep.subr.mxu0 %v1422
      %1455 = vmatpush1.msra.mxu0 %v1420
      %1456 = vmatprep.subr.mxu0 %v1406
      %1457 = vmatpush1.msra.mxu0 %v1405
      %1458 = vmatprep.subr.mxu0 0.0
      %1459 = vmatpush2.msra.mxu0 0.0
      %1460 = vmatprep.subr.mxu0 0.0
      %1461 = vmatpush2.msra.mxu0 0.0
      %1462 = vmatprep.subr.mxu0 0.0
      %1463 = vmatpush2.msra.mxu0 0.0
      %1464 = vmatprep.subr.mxu0 0.0
      %1465 = vmatpush2.msra.mxu0 0.0
      %1466 = vmatprep.subr.mxu0 0.0
      %1467 = vmatpush2.msra.mxu0 0.0
      %1468 = vmatprep.subr.mxu0 0.0
      %1469 = vmatpush2.msra.mxu0 0.0
      %1470 = vmatprep.subr.mxu0 0.0
      %1471 = vmatpush2.msra.mxu0 0.0
      %1472 = vmatprep.subr.mxu0 0.0
      %1473 = vmatpush2.msra.mxu0 0.0
      %1474 = vmatprep.subr.mxu0 0.0
      %1475 = vmatpush2.msra.mxu0 0.0
      %1476 = vmatprep.subr.mxu0 0.0
      %1477 = vmatpush2.msra.mxu0 0.0
      %1478 = vmatprep.subr.mxu0 0.0
      %1479 = vmatpush2.msra.mxu0 0.0
      %1480 = vmatprep.subr.mxu0 0.0
      %1481 = vmatpush2.msra.mxu0 0.0
      %1482 = vmatprep.subr.mxu0 0.0
      %1483 = vmatpush2.msra.mxu0 0.0
      %1484 = vmatprep.subr.mxu0 0.0
      %1485 = vmatpush2.msra.mxu0 0.0
      %1486 = vmatprep.subr.mxu0 0.0
      %1487 = vmatpush2.msra.mxu0 0.0
      %1488 = vmatprep.subr.mxu0 0.0
      %1489 = vmatpush2.msra.mxu0 0.0
      %1490 = vmatprep.mubr.f32.mxu0 0.0
      %1491 = vmatmul.mubr.f32.gmra.mxu0 %v1415
      %v1492 = vpop.f32.mrf.mxu0
      %v1493 = vadd.f32 0.0, %v1492
      %v1494 = vpop.f32.mrf.mxu0
      %v1495 = vadd.f32 0.0, %v1494
      %1496 = vmatprep.mubr.f32.mxu0 0.0
      %1497 = vmatmul.mubr.f32.gmra.mxu0 %v1418
      %v1498 = vpop.f32.mrf.mxu0
      %v1499 = vadd.f32 0.0, %v1498
      %v1500 = vpop.f32.mrf.mxu0
      %v1501 = vadd.f32 0.0, %v1500
      %1502 = vdwg.mxu0
      %1503 = vmatprep.subr.mxu0 0.0
      %1504 = vmatpush1.msra.mxu0 0.0
      %1505 = vmatprep.subr.mxu0 0.0
      %1506 = vmatpush1.msra.mxu0 0.0
      %1507 = vmatprep.subr.mxu0 0.0
      %1508 = vmatpush1.msra.mxu0 0.0
      %1509 = vmatprep.subr.mxu0 0.0
      %1510 = vmatpush1.msra.mxu0 0.0
      %1511 = vmatprep.subr.mxu0 0.0
      %1512 = vmatpush1.msra.mxu0 0.0
      %1513 = vmatprep.subr.mxu0 0.0
      %1514 = vmatpush1.msra.mxu0 0.0
      %1515 = vmatprep.subr.mxu0 0.0
      %1516 = vmatpush1.msra.mxu0 0.0
      %1517 = vmatprep.subr.mxu0 0.0
      %1518 = vmatpush1.msra.mxu0 0.0
      %1519 = vmatprep.subr.mxu0 0.0
      %1520 = vmatpush1.msra.mxu0 0.0
      %1521 = vmatprep.subr.mxu0 0.0
      %1522 = vmatpush1.msra.mxu0 0.0
      %1523 = vmatprep.subr.mxu0 0.0
      %1524 = vmatpush1.msra.mxu0 0.0
      %1525 = vmatprep.subr.mxu0 0.0
      %1526 = vmatpush1.msra.mxu0 0.0
      %1527 = vmatprep.subr.mxu0 0.0
      %1528 = vmatpush1.msra.mxu0 0.0
      %1529 = vmatprep.subr.mxu0 0.0
      %1530 = vmatpush1.msra.mxu0 0.0
      %1531 = vmatprep.subr.mxu0 0.0
      %1532 = vmatpush1.msra.mxu0 %v1424
      %1533 = vmatprep.subr.mxu0 0.0
      %1534 = vmatpush1.msra.mxu0 %v1407
      %1535 = vmatprep.subr.mxu0 0.0
      %1536 = vmatpush2.msra.mxu0 0.0
      %1537 = vmatprep.subr.mxu0 0.0
      %1538 = vmatpush2.msra.mxu0 0.0
      %1539 = vmatprep.subr.mxu0 0.0
      %1540 = vmatpush2.msra.mxu0 0.0
      %1541 = vmatprep.subr.mxu0 0.0
      %1542 = vmatpush2.msra.mxu0 0.0
      %1543 = vmatprep.subr.mxu0 0.0
      %1544 = vmatpush2.msra.mxu0 0.0
      %1545 = vmatprep.subr.mxu0 0.0
      %1546 = vmatpush2.msra.mxu0 0.0
      %1547 = vmatprep.subr.mxu0 0.0
      %1548 = vmatpush2.msra.mxu0 0.0
      %1549 = vmatprep.subr.mxu0 0.0
      %1550 = vmatpush2.msra.mxu0 0.0
      %1551 = vmatprep.subr.mxu0 0.0
      %1552 = vmatpush2.msra.mxu0 0.0
      %1553 = vmatprep.subr.mxu0 0.0
      %1554 = vmatpush2.msra.mxu0 0.0
      %1555 = vmatprep.subr.mxu0 0.0
      %1556 = vmatpush2.msra.mxu0 0.0
      %1557 = vmatprep.subr.mxu0 0.0
      %1558 = vmatpush2.msra.mxu0 0.0
      %1559 = vmatprep.subr.mxu0 0.0
      %1560 = vmatpush2.msra.mxu0 0.0
      %1561 = vmatprep.subr.mxu0 0.0
      %1562 = vmatpush2.msra.mxu0 0.0
      %1563 = vmatprep.subr.mxu0 0.0
      %1564 = vmatpush2.msra.mxu0 0.0
      %1565 = vmatprep.subr.mxu0 0.0
      %1566 = vmatpush2.msra.mxu0 0.0
      %1567 = vmatprep.mubr.f32.mxu0 0.0
      %1568 = vmatmul.mubr.f32.gmra.mxu0 %v1415
      %v1569 = vpop.f32.mrf.mxu0
      %v1570 = vadd.f32 0.0, %v1569
      %v1571 = vpop.f32.mrf.mxu0
      %1572 = vmatprep.mubr.f32.mxu0 0.0
      %1573 = vmatmul.mubr.f32.gmra.mxu0 %v1418
      %v1574 = vpop.f32.mrf.mxu0
      %v1575 = vadd.f32 0.0, %v1574
      %v1576 = vpop.f32.mrf.mxu0
      %1577 = vdwg.mxu0
      %v1578 = vadd.f32 %v1379, %v1493
      %v1579 = vadd.f32 %v1380, %v1495
      %v1580 = vadd.f32 %v1381, %v1570
      %v1581 = vadd.f32 %v1382, %v1499
      %v1582 = vadd.f32 %v1383, %v1501
      %v1583 = vadd.f32 %v1384, %v1575
      %s1584 = scalar_lea.vmem %s1, 112
      %v1585 = vld [vmem:[%s1584] sm:$0xff]
      %v1586 = vld [vmem:[%s1584 + $0x8] sm:$0x3]
      %1587 = vrot.lane.b32.xlu0 %v214, 87
      %v1588 = vpop.permute.xlu0 %1587
      %1589 = vrot.lane.b32.xlu0 %v215, 87
      %v1590 = vpop.permute.xlu0 %1589
      %1591 = vrot.lane.b32.xlu0 %v216, 87
      %v1592 = vpop.permute.xlu0 %1591
      %1593 = vrot.lane.b32.xlu0 %v223, 87
      %v1594 = vpop.permute.xlu0 %1593
      %1595 = vrot.lane.b32.xlu0 %v217, 87
      %v1596 = vpop.permute.xlu0 %1595
      %1597 = vrot.lane.b32.xlu0 %v218, 87
      %v1598 = vpop.permute.xlu0 %1597
      %1599 = vrot.lane.b32.xlu0 %v219, 87
      %v1600 = vpop.permute.xlu0 %1599
      %1601 = vrot.lane.b32.xlu0 %v224, 87
      %v1602 = vpop.permute.xlu0 %1601
      %vm1603 = vcmask 711680
      %v1604 = vsel %vm1603, %v1588, %v1590
      %v1605 = vsel %vm1603, %v1590, %v1592
      %v1606 = vsel %vm1603, %v1592, %v1594
      %v1607 = vsel %vm1603, %v1596, %v1598
      %v1608 = vsel %vm1603, %v1598, %v1600
      %v1609 = vsel %vm1603, %v1600, %v1602
      %v1614 = vsel %vm259, %v1585, 0
      %v1617 = vsel %vm259, %v1586, 0
      %v1619 = vsel %vm266, %v1607, 0
      %v1621 = vsel %vm266, %v1608, 0
      %v1623 = vsel %vm266, %v1609, 0
      %1625 = vmatprep.subr.mxu0 0.0
      %1626 = vmatpush1.msra.mxu0 0.0
      %1627 = vmatprep.subr.mxu0 0.0
      %1628 = vmatpush1.msra.mxu0 0.0
      %1629 = vmatprep.subr.mxu0 0.0
      %1630 = vmatpush1.msra.mxu0 0.0
      %1631 = vmatprep.subr.mxu0 0.0
      %1632 = vmatpush1.msra.mxu0 0.0
      %1633 = vmatprep.subr.mxu0 0.0
      %1634 = vmatpush1.msra.mxu0 0.0
      %1635 = vmatprep.subr.mxu0 0.0
      %1636 = vmatpush1.msra.mxu0 0.0
      %1637 = vmatprep.subr.mxu0 0.0
      %1638 = vmatpush1.msra.mxu0 0.0
      %1639 = vmatprep.subr.mxu0 0.0
      %1640 = vmatpush1.msra.mxu0 0.0
      %1641 = vmatprep.subr.mxu0 0.0
      %1642 = vmatpush1.msra.mxu0 0.0
      %1643 = vmatprep.subr.mxu0 0.0
      %1644 = vmatpush1.msra.mxu0 0.0
      %1645 = vmatprep.subr.mxu0 0.0
      %1646 = vmatpush1.msra.mxu0 0.0
      %1647 = vmatprep.subr.mxu0 0.0
      %1648 = vmatpush1.msra.mxu0 0.0
      %1649 = vmatprep.subr.mxu0 0.0
      %1650 = vmatpush1.msra.mxu0 0.0
      %1651 = vmatprep.subr.mxu0 0.0
      %1652 = vmatpush1.msra.mxu0 0.0
      %1653 = vmatprep.subr.mxu0 %v1621
      %1654 = vmatpush1.msra.mxu0 %v1619
      %1655 = vmatprep.subr.mxu0 %v1605
      %1656 = vmatpush1.msra.mxu0 %v1604
      %1657 = vmatprep.subr.mxu0 0.0
      %1658 = vmatpush2.msra.mxu0 0.0
      %1659 = vmatprep.subr.mxu0 0.0
      %1660 = vmatpush2.msra.mxu0 0.0
      %1661 = vmatprep.subr.mxu0 0.0
      %1662 = vmatpush2.msra.mxu0 0.0
      %1663 = vmatprep.subr.mxu0 0.0
      %1664 = vmatpush2.msra.mxu0 0.0
      %1665 = vmatprep.subr.mxu0 0.0
      %1666 = vmatpush2.msra.mxu0 0.0
      %1667 = vmatprep.subr.mxu0 0.0
      %1668 = vmatpush2.msra.mxu0 0.0
      %1669 = vmatprep.subr.mxu0 0.0
      %1670 = vmatpush2.msra.mxu0 0.0
      %1671 = vmatprep.subr.mxu0 0.0
      %1672 = vmatpush2.msra.mxu0 0.0
      %1673 = vmatprep.subr.mxu0 0.0
      %1674 = vmatpush2.msra.mxu0 0.0
      %1675 = vmatprep.subr.mxu0 0.0
      %1676 = vmatpush2.msra.mxu0 0.0
      %1677 = vmatprep.subr.mxu0 0.0
      %1678 = vmatpush2.msra.mxu0 0.0
      %1679 = vmatprep.subr.mxu0 0.0
      %1680 = vmatpush2.msra.mxu0 0.0
      %1681 = vmatprep.subr.mxu0 0.0
      %1682 = vmatpush2.msra.mxu0 0.0
      %1683 = vmatprep.subr.mxu0 0.0
      %1684 = vmatpush2.msra.mxu0 0.0
      %1685 = vmatprep.subr.mxu0 0.0
      %1686 = vmatpush2.msra.mxu0 0.0
      %1687 = vmatprep.subr.mxu0 0.0
      %1688 = vmatpush2.msra.mxu0 0.0
      %1689 = vmatprep.mubr.f32.mxu0 0.0
      %1690 = vmatmul.mubr.f32.gmra.mxu0 %v1614
      %v1691 = vpop.f32.mrf.mxu0
      %v1692 = vadd.f32 0.0, %v1691
      %v1693 = vpop.f32.mrf.mxu0
      %v1694 = vadd.f32 0.0, %v1693
      %1695 = vmatprep.mubr.f32.mxu0 0.0
      %1696 = vmatmul.mubr.f32.gmra.mxu0 %v1617
      %v1697 = vpop.f32.mrf.mxu0
      %v1698 = vadd.f32 0.0, %v1697
      %v1699 = vpop.f32.mrf.mxu0
      %v1700 = vadd.f32 0.0, %v1699
      %1701 = vdwg.mxu0
      %1702 = vmatprep.subr.mxu0 0.0
      %1703 = vmatpush1.msra.mxu0 0.0
      %1704 = vmatprep.subr.mxu0 0.0
      %1705 = vmatpush1.msra.mxu0 0.0
      %1706 = vmatprep.subr.mxu0 0.0
      %1707 = vmatpush1.msra.mxu0 0.0
      %1708 = vmatprep.subr.mxu0 0.0
      %1709 = vmatpush1.msra.mxu0 0.0
      %1710 = vmatprep.subr.mxu0 0.0
      %1711 = vmatpush1.msra.mxu0 0.0
      %1712 = vmatprep.subr.mxu0 0.0
      %1713 = vmatpush1.msra.mxu0 0.0
      %1714 = vmatprep.subr.mxu0 0.0
      %1715 = vmatpush1.msra.mxu0 0.0
      %1716 = vmatprep.subr.mxu0 0.0
      %1717 = vmatpush1.msra.mxu0 0.0
      %1718 = vmatprep.subr.mxu0 0.0
      %1719 = vmatpush1.msra.mxu0 0.0
      %1720 = vmatprep.subr.mxu0 0.0
      %1721 = vmatpush1.msra.mxu0 0.0
      %1722 = vmatprep.subr.mxu0 0.0
      %1723 = vmatpush1.msra.mxu0 0.0
      %1724 = vmatprep.subr.mxu0 0.0
      %1725 = vmatpush1.msra.mxu0 0.0
      %1726 = vmatprep.subr.mxu0 0.0
      %1727 = vmatpush1.msra.mxu0 0.0
      %1728 = vmatprep.subr.mxu0 0.0
      %1729 = vmatpush1.msra.mxu0 0.0
      %1730 = vmatprep.subr.mxu0 0.0
      %1731 = vmatpush1.msra.mxu0 %v1623
      %1732 = vmatprep.subr.mxu0 0.0
      %1733 = vmatpush1.msra.mxu0 %v1606
      %1734 = vmatprep.subr.mxu0 0.0
      %1735 = vmatpush2.msra.mxu0 0.0
      %1736 = vmatprep.subr.mxu0 0.0
      %1737 = vmatpush2.msra.mxu0 0.0
      %1738 = vmatprep.subr.mxu0 0.0
      %1739 = vmatpush2.msra.mxu0 0.0
      %1740 = vmatprep.subr.mxu0 0.0
      %1741 = vmatpush2.msra.mxu0 0.0
      %1742 = vmatprep.subr.mxu0 0.0
      %1743 = vmatpush2.msra.mxu0 0.0
      %1744 = vmatprep.subr.mxu0 0.0
      %1745 = vmatpush2.msra.mxu0 0.0
      %1746 = vmatprep.subr.mxu0 0.0
      %1747 = vmatpush2.msra.mxu0 0.0
      %1748 = vmatprep.subr.mxu0 0.0
      %1749 = vmatpush2.msra.mxu0 0.0
      %1750 = vmatprep.subr.mxu0 0.0
      %1751 = vmatpush2.msra.mxu0 0.0
      %1752 = vmatprep.subr.mxu0 0.0
      %1753 = vmatpush2.msra.mxu0 0.0
      %1754 = vmatprep.subr.mxu0 0.0
      %1755 = vmatpush2.msra.mxu0 0.0
      %1756 = vmatprep.subr.mxu0 0.0
      %1757 = vmatpush2.msra.mxu0 0.0
      %1758 = vmatprep.subr.mxu0 0.0
      %1759 = vmatpush2.msra.mxu0 0.0
      %1760 = vmatprep.subr.mxu0 0.0
      %1761 = vmatpush2.msra.mxu0 0.0
      %1762 = vmatprep.subr.mxu0 0.0
      %1763 = vmatpush2.msra.mxu0 0.0
      %1764 = vmatprep.subr.mxu0 0.0
      %1765 = vmatpush2.msra.mxu0 0.0
      %1766 = vmatprep.mubr.f32.mxu0 0.0
      %1767 = vmatmul.mubr.f32.gmra.mxu0 %v1614
      %v1768 = vpop.f32.mrf.mxu0
      %v1769 = vadd.f32 0.0, %v1768
      %v1770 = vpop.f32.mrf.mxu0
      %1771 = vmatprep.mubr.f32.mxu0 0.0
      %1772 = vmatmul.mubr.f32.gmra.mxu0 %v1617
      %v1773 = vpop.f32.mrf.mxu0
      %v1774 = vadd.f32 0.0, %v1773
      %v1775 = vpop.f32.mrf.mxu0
      %1776 = vdwg.mxu0
      %v1777 = vadd.f32 %v1578, %v1692
      %v1778 = vadd.f32 %v1579, %v1694
      %v1779 = vadd.f32 %v1580, %v1769
      %v1780 = vadd.f32 %v1581, %v1698
      %v1781 = vadd.f32 %v1582, %v1700
      %v1782 = vadd.f32 %v1583, %v1774
      %s1783 = scalar_lea.vmem %s1, 128
      %v1784 = vld [vmem:[%s1783] sm:$0xff]
      %v1785 = vld [vmem:[%s1783 + $0x8] sm:$0x3]
      %1786 = vrot.lane.b32.xlu0 %v214, 86
      %v1787 = vpop.permute.xlu0 %1786
      %1788 = vrot.lane.b32.xlu0 %v215, 86
      %v1789 = vpop.permute.xlu0 %1788
      %1790 = vrot.lane.b32.xlu0 %v216, 86
      %v1791 = vpop.permute.xlu0 %1790
      %1792 = vrot.lane.b32.xlu0 %v223, 86
      %v1793 = vpop.permute.xlu0 %1792
      %1794 = vrot.lane.b32.xlu0 %v217, 86
      %v1795 = vpop.permute.xlu0 %1794
      %1796 = vrot.lane.b32.xlu0 %v218, 86
      %v1797 = vpop.permute.xlu0 %1796
      %1798 = vrot.lane.b32.xlu0 %v219, 86
      %v1799 = vpop.permute.xlu0 %1798
      %1800 = vrot.lane.b32.xlu0 %v224, 86
      %v1801 = vpop.permute.xlu0 %1800
      %vm1802 = vcmask 703488
      %v1803 = vsel %vm1802, %v1787, %v1789
      %v1804 = vsel %vm1802, %v1789, %v1791
      %v1805 = vsel %vm1802, %v1791, %v1793
      %v1806 = vsel %vm1802, %v1795, %v1797
      %v1807 = vsel %vm1802, %v1797, %v1799
      %v1808 = vsel %vm1802, %v1799, %v1801
      %v1813 = vsel %vm259, %v1784, 0
      %v1816 = vsel %vm259, %v1785, 0
      %v1818 = vsel %vm266, %v1806, 0
      %v1820 = vsel %vm266, %v1807, 0
      %v1822 = vsel %vm266, %v1808, 0
      %1824 = vmatprep.subr.mxu0 0.0
      %1825 = vmatpush1.msra.mxu0 0.0
      %1826 = vmatprep.subr.mxu0 0.0
      %1827 = vmatpush1.msra.mxu0 0.0
      %1828 = vmatprep.subr.mxu0 0.0
      %1829 = vmatpush1.msra.mxu0 0.0
      %1830 = vmatprep.subr.mxu0 0.0
      %1831 = vmatpush1.msra.mxu0 0.0
      %1832 = vmatprep.subr.mxu0 0.0
      %1833 = vmatpush1.msra.mxu0 0.0
      %1834 = vmatprep.subr.mxu0 0.0
      %1835 = vmatpush1.msra.mxu0 0.0
      %1836 = vmatprep.subr.mxu0 0.0
      %1837 = vmatpush1.msra.mxu0 0.0
      %1838 = vmatprep.subr.mxu0 0.0
      %1839 = vmatpush1.msra.mxu0 0.0
      %1840 = vmatprep.subr.mxu0 0.0
      %1841 = vmatpush1.msra.mxu0 0.0
      %1842 = vmatprep.subr.mxu0 0.0
      %1843 = vmatpush1.msra.mxu0 0.0
      %1844 = vmatprep.subr.mxu0 0.0
      %1845 = vmatpush1.msra.mxu0 0.0
      %1846 = vmatprep.subr.mxu0 0.0
      %1847 = vmatpush1.msra.mxu0 0.0
      %1848 = vmatprep.subr.mxu0 0.0
      %1849 = vmatpush1.msra.mxu0 0.0
      %1850 = vmatprep.subr.mxu0 0.0
      %1851 = vmatpush1.msra.mxu0 0.0
      %1852 = vmatprep.subr.mxu0 %v1820
      %1853 = vmatpush1.msra.mxu0 %v1818
      %1854 = vmatprep.subr.mxu0 %v1804
      %1855 = vmatpush1.msra.mxu0 %v1803
      %1856 = vmatprep.subr.mxu0 0.0
      %1857 = vmatpush2.msra.mxu0 0.0
      %1858 = vmatprep.subr.mxu0 0.0
      %1859 = vmatpush2.msra.mxu0 0.0
      %1860 = vmatprep.subr.mxu0 0.0
      %1861 = vmatpush2.msra.mxu0 0.0
      %1862 = vmatprep.subr.mxu0 0.0
      %1863 = vmatpush2.msra.mxu0 0.0
      %1864 = vmatprep.subr.mxu0 0.0
      %1865 = vmatpush2.msra.mxu0 0.0
      %1866 = vmatprep.subr.mxu0 0.0
      %1867 = vmatpush2.msra.mxu0 0.0
      %1868 = vmatprep.subr.mxu0 0.0
      %1869 = vmatpush2.msra.mxu0 0.0
      %1870 = vmatprep.subr.mxu0 0.0
      %1871 = vmatpush2.msra.mxu0 0.0
      %1872 = vmatprep.subr.mxu0 0.0
      %1873 = vmatpush2.msra.mxu0 0.0
      %1874 = vmatprep.subr.mxu0 0.0
      %1875 = vmatpush2.msra.mxu0 0.0
      %1876 = vmatprep.subr.mxu0 0.0
      %1877 = vmatpush2.msra.mxu0 0.0
      %1878 = vmatprep.subr.mxu0 0.0
      %1879 = vmatpush2.msra.mxu0 0.0
      %1880 = vmatprep.subr.mxu0 0.0
      %1881 = vmatpush2.msra.mxu0 0.0
      %1882 = vmatprep.subr.mxu0 0.0
      %1883 = vmatpush2.msra.mxu0 0.0
      %1884 = vmatprep.subr.mxu0 0.0
      %1885 = vmatpush2.msra.mxu0 0.0
      %1886 = vmatprep.subr.mxu0 0.0
      %1887 = vmatpush2.msra.mxu0 0.0
      %1888 = vmatprep.mubr.f32.mxu0 0.0
      %1889 = vmatmul.mubr.f32.gmra.mxu0 %v1813
      %v1890 = vpop.f32.mrf.mxu0
      %v1891 = vadd.f32 0.0, %v1890
      %v1892 = vpop.f32.mrf.mxu0
      %v1893 = vadd.f32 0.0, %v1892
      %1894 = vmatprep.mubr.f32.mxu0 0.0
      %1895 = vmatmul.mubr.f32.gmra.mxu0 %v1816
      %v1896 = vpop.f32.mrf.mxu0
      %v1897 = vadd.f32 0.0, %v1896
      %v1898 = vpop.f32.mrf.mxu0
      %v1899 = vadd.f32 0.0, %v1898
      %1900 = vdwg.mxu0
      %1901 = vmatprep.subr.mxu0 0.0
      %1902 = vmatpush1.msra.mxu0 0.0
      %1903 = vmatprep.subr.mxu0 0.0
      %1904 = vmatpush1.msra.mxu0 0.0
      %1905 = vmatprep.subr.mxu0 0.0
      %1906 = vmatpush1.msra.mxu0 0.0
      %1907 = vmatprep.subr.mxu0 0.0
      %1908 = vmatpush1.msra.mxu0 0.0
      %1909 = vmatprep.subr.mxu0 0.0
      %1910 = vmatpush1.msra.mxu0 0.0
      %1911 = vmatprep.subr.mxu0 0.0
      %1912 = vmatpush1.msra.mxu0 0.0
      %1913 = vmatprep.subr.mxu0 0.0
      %1914 = vmatpush1.msra.mxu0 0.0
      %1915 = vmatprep.subr.mxu0 0.0
      %1916 = vmatpush1.msra.mxu0 0.0
      %1917 = vmatprep.subr.mxu0 0.0
      %1918 = vmatpush1.msra.mxu0 0.0
      %1919 = vmatprep.subr.mxu0 0.0
      %1920 = vmatpush1.msra.mxu0 0.0
      %1921 = vmatprep.subr.mxu0 0.0
      %1922 = vmatpush1.msra.mxu0 0.0
      %1923 = vmatprep.subr.mxu0 0.0
      %1924 = vmatpush1.msra.mxu0 0.0
      %1925 = vmatprep.subr.mxu0 0.0
      %1926 = vmatpush1.msra.mxu0 0.0
      %1927 = vmatprep.subr.mxu0 0.0
      %1928 = vmatpush1.msra.mxu0 0.0
      %1929 = vmatprep.subr.mxu0 0.0
      %1930 = vmatpush1.msra.mxu0 %v1822
      %1931 = vmatprep.subr.mxu0 0.0
      %1932 = vmatpush1.msra.mxu0 %v1805
      %1933 = vmatprep.subr.mxu0 0.0
      %1934 = vmatpush2.msra.mxu0 0.0
      %1935 = vmatprep.subr.mxu0 0.0
      %1936 = vmatpush2.msra.mxu0 0.0
      %1937 = vmatprep.subr.mxu0 0.0
      %1938 = vmatpush2.msra.mxu0 0.0
      %1939 = vmatprep.subr.mxu0 0.0
      %1940 = vmatpush2.msra.mxu0 0.0
      %1941 = vmatprep.subr.mxu0 0.0
      %1942 = vmatpush2.msra.mxu0 0.0
      %1943 = vmatprep.subr.mxu0 0.0
      %1944 = vmatpush2.msra.mxu0 0.0
      %1945 = vmatprep.subr.mxu0 0.0
      %1946 = vmatpush2.msra.mxu0 0.0
      %1947 = vmatprep.subr.mxu0 0.0
      %1948 = vmatpush2.msra.mxu0 0.0
      %1949 = vmatprep.subr.mxu0 0.0
      %1950 = vmatpush2.msra.mxu0 0.0
      %1951 = vmatprep.subr.mxu0 0.0
      %1952 = vmatpush2.msra.mxu0 0.0
      %1953 = vmatprep.subr.mxu0 0.0
      %1954 = vmatpush2.msra.mxu0 0.0
      %1955 = vmatprep.subr.mxu0 0.0
      %1956 = vmatpush2.msra.mxu0 0.0
      %1957 = vmatprep.subr.mxu0 0.0
      %1958 = vmatpush2.msra.mxu0 0.0
      %1959 = vmatprep.subr.mxu0 0.0
      %1960 = vmatpush2.msra.mxu0 0.0
      %1961 = vmatprep.subr.mxu0 0.0
      %1962 = vmatpush2.msra.mxu0 0.0
      %1963 = vmatprep.subr.mxu0 0.0
      %1964 = vmatpush2.msra.mxu0 0.0
      %1965 = vmatprep.mubr.f32.mxu0 0.0
      %1966 = vmatmul.mubr.f32.gmra.mxu0 %v1813
      %v1967 = vpop.f32.mrf.mxu0
      %v1968 = vadd.f32 0.0, %v1967
      %v1969 = vpop.f32.mrf.mxu0
      %1970 = vmatprep.mubr.f32.mxu0 0.0
      %1971 = vmatmul.mubr.f32.gmra.mxu0 %v1816
      %v1972 = vpop.f32.mrf.mxu0
      %v1973 = vadd.f32 0.0, %v1972
      %v1974 = vpop.f32.mrf.mxu0
      %1975 = vdwg.mxu0
      %v1976 = vadd.f32 %v1777, %v1891
      %v1977 = vadd.f32 %v1778, %v1893
      %v1978 = vadd.f32 %v1779, %v1968
      %v1979 = vadd.f32 %v1780, %v1897
      %v1980 = vadd.f32 %v1781, %v1899
      %v1981 = vadd.f32 %v1782, %v1973
      %1982 = vst [vmem:[%s205] sm:$0xff] %v1976
      %1983 = vst [vmem:[%s205 + $0x8] sm:$0xff] %v1977
      %1984 = vst [vmem:[%s205 + $0x10] sm:$0xff] %v1978
      %1985 = vst [vmem:[%s205 + $0x18] sm:$0x3] %v1979
      %1986 = vst [vmem:[%s205 + $0x20] sm:$0x3] %v1980
      %1987 = vst [vmem:[%s205 + $0x28] sm:$0x3] %v1981
      %v1989 = vlaneseq
      %v1990 = vshrl.u32 %v1989, 7
      %v1991 = vsub.s32 0, %v1990
      %v1992 = vrot.slane %v211, %v1991
      %v1993 = vlaneseq
      %v1994 = vshrl.u32 %v1993, 7
      %v1995 = vsub.s32 1, %v1994
      %v1996 = vrot.slane %v211, %v1995
      %v1997 = vlaneseq
      %v1998 = vshrl.u32 %v1997, 7
      %v1999 = vsub.s32 2, %v1998
      %v2000 = vrot.slane %v211, %v1999
      %v2004 = vmul.f32 %v1976, %v1992
      %v2005 = vmul.f32 %v1977, %v1996
      %v2006 = vmul.f32 %v1978, %v2000
      %v2007 = vmul.f32 %v1979, %v1992
      %v2008 = vmul.f32 %v1980, %v1996
      %v2009 = vmul.f32 %v1981, %v2000
      %v2010 = vadd.f32 %v2004, %v2005
      %v2011 = vadd.f32 %v2010, %v2006
      %2012 = vadd.xlane.f32.xlu0 %v2011
      %v2013 = vpop.xlane.xlu0 %2012
      %v2014 = vsel %vm266, %v2007, 0.0
      %v2015 = vsel %vm266, %v2008, 0.0
      %v2016 = vadd.f32 %v2014, %v2015
      %v2017 = vsel %vm266, %v2009, 0.0
      %v2018 = vadd.f32 %v2016, %v2017
      %2019 = vadd.xlane.f32.xlu0 %v2018
      %v2020 = vpop.xlane.xlu0 %2019
      %v2021 = vadd.f32 %v2013, 0.0
      %v2022 = vadd.f32 %v2020, 0.0
      %v2023 = vmul.f32 %v2004, %v1976
      %v2024 = vmul.f32 %v2005, %v1977
      %v2025 = vmul.f32 %v2006, %v1978
      %v2026 = vmul.f32 %v2007, %v1979
      %v2027 = vmul.f32 %v2008, %v1980
      %v2028 = vmul.f32 %v2009, %v1981
      %v2029 = vadd.f32 %v2023, %v2024
      %v2030 = vadd.f32 %v2029, %v2025
      %2031 = vadd.xlane.f32.xlu0 %v2030
      %v2032 = vpop.xlane.xlu0 %2031
      %v2033 = vsel %vm266, %v2026, 0.0
      %v2034 = vsel %vm266, %v2027, 0.0
      %v2035 = vadd.f32 %v2033, %v2034
      %v2036 = vsel %vm266, %v2028, 0.0
      %v2037 = vadd.f32 %v2035, %v2036
      %2038 = vadd.xlane.f32.xlu0 %v2037
      %v2039 = vpop.xlane.xlu0 %2038
      %v2040 = vadd.f32 %v2032, 0.0
      %v2041 = vadd.f32 %v2039, 0.0
      %v2042 = vlaneseq
      %v2043 = vand.u32 %v2042, 127
      %vm2044 = vcmp.eq.s32.totalorder %v2043, 0
      %vm2045 = vcmp.eq.s32.totalorder %v2043, 1
      %v2046 = vsel %vm2045, %v2040, 0.0
      %v2047 = vsel %vm2045, %v2041, 0.0
      %v2048 = vsel %vm2044, %v2021, %v2046
      %v2049 = vsel %vm2044, %v2022, %v2047
      %2050 = vst [vmem:[%s210] sm:$0xff] %v2048
      %2051 = vst [vmem:[%s210 + $0x8] sm:$0x3] %v2049
      %p2052 = scmp.lt.s32.totalorder %s16, 1
      %s2053 = scalar_select %p2052, %s16, 1
      %s2054 = smul.addr %s2053, 6
      %s2055 = smul.addr %s2054, 8
      %s2056 = scalar_lea.vmem %s3, %s2055
      %p2057 = scmp.lt.s32.totalorder %s16, 1
      %s2058 = scalar_select %p2057, %s16, 1
      %s2059 = smul.addr %s2058, 2
      %s2060 = smul.addr %s2059, 8
      %s2061 = scalar_lea.vmem %s4, %s2060
      // Predicated region
      $region33: #{bn_after_conv_transpose2d.1} parent=31 // pred_check
        %p2062 = pneg %p102
      $region34: #{bn_after_conv_transpose2d.1} parent=31 // pred_check_branch
        %2064 = sbr.rel (%p2062) target = $region36
      $region35: #{bn_after_conv_transpose2d.1} parent=31 // pred_region
        _
      $region36: #{bn_after_conv_transpose2d.1} parent=31 // pred_fallthru
        _
      // Predicated region
      $region37: #{bn_after_conv_transpose2d.1} parent=31 // pred_check
        %p2065 = pneg %p128
      $region38: #{bn_after_conv_transpose2d.1} parent=31 // pred_check_branch
        %2067 = sbr.rel (%p2065) target = $region40
      $region39: #{bn_after_conv_transpose2d.1} parent=31 // pred_region
        _
      $region40: #{bn_after_conv_transpose2d.1} parent=31 // pred_fallthru
        _
    $region32: #{bn_after_conv_transpose2d.1} parent=5 // pred_fallthru
      _
    %p2068 = scmp.le.s32.totalorder 2, %s11
    // Predicated region
    $region41: #{bn_after_conv_transpose2d.1} parent=5 // pred_check
      %p2069 = pneg %p2068
    $region42: #{bn_after_conv_transpose2d.1} parent=5 // pred_check_branch
      %2071 = sbr.rel (%p2069) target = $region44
    $region43: #{bn_after_conv_transpose2d.1} parent=5 // pred_region
      %s2072 = ssub.s32 %s11, 2
      // Predicated region
      $region45: #{bn_after_conv_transpose2d.1} parent=43 // pred_check
        %p2073 = pneg %p108
      $region46: #{bn_after_conv_transpose2d.1} parent=43 // pred_check_branch
        %2075 = sbr.rel (%p2073) target = $region48
      $region47: #{bn_after_conv_transpose2d.1} parent=43 // pred_region
        %p2076 = scmp.lt.s32.totalorder %s17, 1
        %s2077 = scalar_select %p2076, %s17, 1
        %s2078 = smul.addr %s2077, 6
        %s2079 = smul.addr %s2078, 8
        %s2080 = scalar_lea.vmem %s3, %s2079
      $region48: #{bn_after_conv_transpose2d.1} parent=43 // pred_fallthru
        _
      // Predicated region
      $region49: #{bn_after_conv_transpose2d.1} parent=43 // pred_check
        %p2081 = pneg %p134
      $region50: #{bn_after_conv_transpose2d.1} parent=43 // pred_check_branch
        %2083 = sbr.rel (%p2081) target = $region52
      $region51: #{bn_after_conv_transpose2d.1} parent=43 // pred_region
        %p2084 = scmp.lt.s32.totalorder %s17, 1
        %s2085 = scalar_select %p2084, %s17, 1
        %s2086 = smul.addr %s2085, 2
        %s2087 = smul.addr %s2086, 8
        %s2088 = scalar_lea.vmem %s4, %s2087
      $region52: #{bn_after_conv_transpose2d.1} parent=43 // pred_fallthru
        _
    $region44: #{bn_after_conv_transpose2d.1} parent=5 // pred_fallthru
      _
  $region6: #{bn_after_conv_transpose2d.1} parent=0 // loop_footer
    %s15 = sadd.s32 1, %s11
  $region7: #{bn_after_conv_transpose2d.1} parent=0 // loop_footer_branch
    %10 = sbr.rel target = $region3
  $region8: #{bn_after_conv_transpose2d.1} parent=0 // loop_exit
    _

</llo_original>
